<compile_context>
chip_gen: v7x
topology: tpu7x:2x2x1
jax: 0.10.0
libtpu: 0.0.40
codegen_flags: <defaults>
</compile_context>

<pallas_src>
import math

import jax
import jax.numpy as jnp
from jax import lax
from jax.experimental import pallas as pl
from jax.experimental.pallas import tpu as pltpu

D_MODEL = 32
N_HEADS = 4
D_FF = 64
EPS = 1e-6
NEG_INF = -1e9


def _layernorm(x, a, b):
    # torch LayerNorm-in-this-module: mean over last dim, std with Bessel
    # correction (N-1), normalize by (std + eps) -> a*(x-mean)/(std+eps)+b.
    d = x.shape[-1]
    mean = jnp.mean(x, axis=-1, keepdims=True)
    var = jnp.sum((x - mean) ** 2, axis=-1, keepdims=True) * (1.0 / (d - 1))
    inv = 1.0 / (jnp.sqrt(var) + EPS)
    return a * ((x - mean) * inv) + b


def encoder_layer_kernel(x_ref, mask_ref, wqk_ref, wvo_ref, w1_ref, w2_ref,
                         vec_ref, o_ref):
    BB, S, D = x_ref.shape
    N = BB * S
    d_k = D // N_HEADS

    x = x_ref[...].reshape(N, D)            # layout-preserving leading-dim fold
    vec = vec_ref[...]                      # (8, vw) packed bias / LN params
    b_qk = vec[0:1, :2 * D]
    b_o = vec[1:2, :D]                      # bo + bv @ Wo (folded host-side)
    b_1 = vec[2:3, :D_FF]
    b_2 = vec[3:4, :D]
    ln1a, ln1b = vec[4:5, :D], vec[5:6, :D]
    ln2a, ln2b = vec[6:7, :D], vec[7:8, :D]

    # Additive score bias (one f32 slab reused by every head):
    #   0      valid (same batch element, key attended)
    #   -1e9   same batch element, masked key   (matches torch masked_fill value)
    #   -2e9   different batch element          (block-diagonal batch mask, strictly
    #          below -1e9 so cross-batch keys never win -> no cross-batch V leakage
    #          even for fully-masked query rows)
    # NOTE: float equality with 0 mirrors torch's `mask == 0`; mask must be 0/1.
    # NOTE(degenerate case): a query row whose *entire own* key mask is 0 gets
    # softmax over exp(s - max) of its own keys instead of the reference's exact
    # uniform distribution; both are semantically meaningless and not exercised.
    key_mask = mask_ref[0]                                        # (1, N)
    key_bias = jnp.where(key_mask == 0.0, NEG_INF, 0.0)           # (1, N)
    if BB > 1:
        row_b = lax.broadcasted_iota(jnp.int32, (N, N), 0) // S
        col_b = lax.broadcasted_iota(jnp.int32, (N, N), 1) // S
        bias = jnp.where(row_b != col_b, 2.0 * NEG_INF, key_bias)  # (N, N)
    else:
        bias = key_bias                                            # no batch mixing

    # ---- sublayer 1: x + self_attn(LN(x), LN(x), LN(x), mask) ----
    xn = _layernorm(x, ln1a, ln1b)
    qk = jnp.dot(xn, wqk_ref[...], preferred_element_type=jnp.float32) + b_qk
    q = qk[:, :D]                           # 1/sqrt(d_k) already folded into Wq/bq
    k = qk[:, D:]
    # Fused V*Wo projection: vprime[:, h*D:(h+1)*D] = xn @ (Wv_h @ Wo_h), lane-dense.
    vprime = jnp.dot(xn, wvo_ref[...], preferred_element_type=jnp.float32)  # (N, H*D)

    ones_col = jnp.ones((N, 1), jnp.float32)  # MXU row-sum operand (keeps XLU free)
    attn = b_o                                # broadcasts up to (N, D) on first add
    for h in range(N_HEADS):                  # static; per-head slabs are lane-dense
        sl = slice(h * d_k, (h + 1) * d_k)
        s_h = lax.dot_general(
            q[:, sl], k[:, sl],
            dimension_numbers=(((1,), (1,)), ((), ())),
            preferred_element_type=jnp.float32)                       # (N, N)
        s_h = s_h + bias
        s_h = s_h - jnp.max(s_h, axis=-1, keepdims=True)
        p_h = jnp.exp(s_h)                                            # unnormalized
        denom = jnp.dot(p_h, ones_col, preferred_element_type=jnp.float32)  # (N, 1)
        ctx = jnp.dot(p_h, vprime[:, h * D:(h + 1) * D],
                      preferred_element_type=jnp.float32)             # (N, D)
        # normalize-late: scale the (N, D) context, not the (N, N) probabilities
        attn = attn + ctx * pl.reciprocal(denom, approx=True)         # EUP recip
    x1 = x + attn                             # residual (dropout = identity)

    # ---- sublayer 2: x + FFN(LN(x)) ----
    xn2 = _layernorm(x1, ln2a, ln2b)
    h1 = jnp.dot(xn2, w1_ref[...], preferred_element_type=jnp.float32) + b_1
    h1 = jnp.maximum(h1, 0.0)
    ff = jnp.dot(h1, w2_ref[...], preferred_element_type=jnp.float32) + b_2
    o_ref[...] = (x1 + ff).reshape(BB, S, D)  # layout-preserving split


def _round_up(a, m):
    return pl.cdiv(a, m) * m


def _pick_block_b(B, S, target_rows=128):
    """Batch-block size: keeps N = block_b*S a multiple of 8 (sublane fold), aims
    for N ~= 128 rows per step, never pads tiny batches up to a whole big block,
    and prefers >= 2 grid steps so ("parallel",) can shard across v7x's 2 TCs."""
    granule = 8 // math.gcd(S, 8)             # smallest bb with (bb*S) % 8 == 0
    bb = max(granule, ((target_rows // S) // granule) * granule)
    b_min = _round_up(B, granule)             # smallest legal padded batch
    bb = min(bb, b_min)
    if b_min // bb < 2 and b_min >= 2 * granule:
        bb = _round_up(pl.cdiv(b_min, 2), granule)   # split into >= 2 blocks (v7x)
    return bb


@jax.jit
def encoder_layer(x, mask, params):
    """x: (B, S, D) f32, mask: (B, 1, S) f32 (1 = attend, 0 = masked key)."""
    B, S, D = x.shape
    assert D == D_MODEL
    d_k = D // N_HEADS
    scale = 1.0 / math.sqrt(d_k)

    block_b = _pick_block_b(B, S)
    assert (block_b * S) % 8 == 0
    Bp = _round_up(B, block_b)
    num_blocks = Bp // block_b
    N = block_b * S

    if Bp != B:  # pad batch with zeros (finite -> safe), mask padded with 1s
        x = jnp.pad(x, ((0, Bp - B), (0, 0), (0, 0)))
        mask = jnp.pad(mask, ((0, Bp - B), (0, 0), (0, 0)), constant_values=1.0)

    # --- host-side parameter fusion (tiny (32,32)-scale ops, fused/folded by XLA) ---
    #  * 1/sqrt(d_k) folded into Wq / bq
    #  * Wvo = concat_h(Wv[:,h*dk:(h+1)*dk] @ Wo[h*dk:(h+1)*dk,:])   (D, H*D)
    #  * bv's contribution collapses to bv @ Wo (softmax rows sum to 1) -> into bo
    wqk = jnp.concatenate([params["wq"] * scale, params["wk"]], axis=1)      # (D, 2D)
    bqk = jnp.concatenate([params["bq"] * scale, params["bk"]], axis=1)      # (1, 2D)
    wvo = jnp.concatenate(
        [params["wv"][:, h * d_k:(h + 1) * d_k] @ params["wo"][h * d_k:(h + 1) * d_k, :]
         for h in range(N_HEADS)], axis=1)                                   # (D, H*D)
    bo_eff = params["bo"] + params["bv"] @ params["wo"]                      # (1, D)

    vw = max(2 * D, D_FF)
    vecs = jnp.zeros((8, vw), jnp.float32)
    vecs = vecs.at[0, :2 * D].set(bqk[0])
    vecs = vecs.at[1, :D].set(bo_eff[0])
    vecs = vecs.at[2, :D_FF].set(params["b1"][0])
    vecs = vecs.at[3, :D].set(params["b2"][0])
    vecs = vecs.at[4, :D].set(params["ln1a"][0])
    vecs = vecs.at[5, :D].set(params["ln1b"][0])
    vecs = vecs.at[6, :D].set(params["ln2a"][0])
    vecs = vecs.at[7, :D].set(params["ln2b"][0])

    # Per-block flattened key mask, lane-dense: block i holds the (block_b*S,)
    # key mask of its block_b batch elements (index b_local*S + s).
    mask_flat = mask.reshape(num_blocks, 1, N)

    out = pl.pallas_call(
        encoder_layer_kernel,
        out_shape=jax.ShapeDtypeStruct((Bp, S, D), jnp.float32),
        grid=(num_blocks,),
        in_specs=[
            pl.BlockSpec((block_b, S, D), lambda i: (i, 0, 0)),
            pl.BlockSpec((1, 1, N), lambda i: (i, 0, 0)),
            pl.BlockSpec((D, 2 * D), lambda i: (0, 0)),
            pl.BlockSpec((D, N_HEADS * D), lambda i: (0, 0)),
            pl.BlockSpec((D, D_FF), lambda i: (0, 0)),
            pl.BlockSpec((D_FF, D), lambda i: (0, 0)),
            pl.BlockSpec((8, vw), lambda i: (0, 0)),
        ],
        out_specs=pl.BlockSpec((block_b, S, D), lambda i: (i, 0, 0)),
        compiler_params=pltpu.CompilerParams(
            dimension_semantics=("parallel",)),
    )(x, mask_flat, wqk, wvo, params["w1"], params["w2"], vecs)
    return out[:B]


# ------------------------- pure-JAX reference ------------------------------
def encoder_layer_ref(x, mask, params):
    d_k = D_MODEL // N_HEADS
    B, S, D = x.shape

    def ln(x, a, b):
        mean = jnp.mean(x, axis=-1, keepdims=True)
        var = jnp.sum((x - mean) ** 2, axis=-1, keepdims=True) / (D - 1)
        return a * (x - mean) / (jnp.sqrt(var) + EPS) + b

    xn = ln(x, params["ln1a"][0], params["ln1b"][0])
    q = xn @ params["wq"] + params["bq"][0]
    k = xn @ params["wk"] + params["bk"][0]
    v = xn @ params["wv"] + params["bv"][0]
    q = q.reshape(B, S, N_HEADS, d_k).transpose(0, 2, 1, 3)
    k = k.reshape(B, S, N_HEADS, d_k).transpose(0, 2, 1, 3)
    v = v.reshape(B, S, N_HEADS, d_k).transpose(0, 2, 1, 3)
    scores = jnp.einsum("bhqd,bhkd->bhqk", q, k) / math.sqrt(d_k)
    scores = jnp.where(mask[:, None, :, :] == 0, -1e9, scores)
    p = jax.nn.softmax(scores, axis=-1)
    o = jnp.einsum("bhqk,bhkd->bhqd", p, v).transpose(0, 2, 1, 3).reshape(B, S, D)
    x = x + (o @ params["wo"] + params["bo"][0])

    xn2 = ln(x, params["ln2a"][0], params["ln2b"][0])
    ff = jnp.maximum(xn2 @ params["w1"] + params["b1"][0], 0.0) @ params["w2"] + params["b2"][0]
    return x + ff


if __name__ == "__main__":
    key = jax.random.PRNGKey(0)
    B, S = 2, 8

    keys = jax.random.split(key, 16)
    scale = 0.1
    params = {
        "wq": scale * jax.random.normal(keys[0], (D_MODEL, D_MODEL), jnp.float32),
        "bq": scale * jax.random.normal(keys[1], (1, D_MODEL), jnp.float32),
        "wk": scale * jax.random.normal(keys[2], (D_MODEL, D_MODEL), jnp.float32),
        "bk": scale * jax.random.normal(keys[3], (1, D_MODEL), jnp.float32),
        "wv": scale * jax.random.normal(keys[4], (D_MODEL, D_MODEL), jnp.float32),
        "bv": scale * jax.random.normal(keys[5], (1, D_MODEL), jnp.float32),
        "wo": scale * jax.random.normal(keys[6], (D_MODEL, D_MODEL), jnp.float32),
        "bo": scale * jax.random.normal(keys[7], (1, D_MODEL), jnp.float32),
        "w1": scale * jax.random.normal(keys[8], (D_MODEL, D_FF), jnp.float32),
        "b1": scale * jax.random.normal(keys[9], (1, D_FF), jnp.float32),
        "w2": scale * jax.random.normal(keys[10], (D_FF, D_MODEL), jnp.float32),
        "b2": scale * jax.random.normal(keys[11], (1, D_MODEL), jnp.float32),
        "ln1a": jnp.ones((1, D_MODEL), jnp.float32),
        "ln1b": jnp.zeros((1, D_MODEL), jnp.float32),
        "ln2a": jnp.ones((1, D_MODEL), jnp.float32),
        "ln2b": jnp.zeros((1, D_MODEL), jnp.float32),
    }

    x = jax.random.normal(keys[12], (B, S, D_MODEL), jnp.float32)
    # mask: batch 0 attends to all 8 keys, batch 1 only to the first 5
    valid_lens = jnp.array([8, 5])
    mask = (jnp.arange(S)[None, :] < valid_lens[:, None]).astype(jnp.float32)
    mask = mask[:, None, :]  # (B, 1, S)

    out = encoder_layer(x, mask, params)
    out = jax.block_until_ready(out)

    ref = encoder_layer_ref(x, mask, params)
    assert out.shape == (B, S, D_MODEL)
    # 5e-3 tolerance leaves headroom for the EUP approximate reciprocal used in the
    # softmax normalization; everything else is f32 math (Wv*Wo fusion only reorders
    # exact associativity-level rounding).
    err = float(jnp.max(jnp.abs(out - ref)))
    assert err < 5e-3, f"mismatch vs JAX reference: max abs err {err}"

    # TODO(synk): dropout layers are identity here (eval-mode semantics).
    print("KERNEL_OK")
</pallas_src>

<mosaic_0001>
module attributes {stable_mosaic.version = 11 : i64} {
  func.func @encoder_layer_kernel(%arg0: i32, %arg1: memref<1x8x32xf32, #tpu.memory_space<vmem>>, %arg2: memref<1x1x8xf32, #tpu.memory_space<vmem>>, %arg3: memref<32x64xf32, #tpu.memory_space<vmem>>, %arg4: memref<32x128xf32, #tpu.memory_space<vmem>>, %arg5: memref<32x64xf32, #tpu.memory_space<vmem>>, %arg6: memref<64x32xf32, #tpu.memory_space<vmem>>, %arg7: memref<8x64xf32, #tpu.memory_space<vmem>>, %arg8: memref<1x8x32xf32, #tpu.memory_space<vmem>>) attributes {dimension_semantics = [#tpu.dimension_semantics<parallel>], iteration_bounds = array<i64: 2>, scalar_prefetch = 0 : i64, scratch_operands = 0 : i64, tpu.core_type = #tpu.core_type<tc>, window_params = [{transform_indices = @transform_0, window_bounds = array<i64: 1, 8, 32>}, {transform_indices = @transform_1, window_bounds = array<i64: 1, 1, 8>}, {pipeline_mode = #tpu.pipeline_mode<synchronous>, transform_indices = @transform_2, window_bounds = array<i64: 32, 64>}, {pipeline_mode = #tpu.pipeline_mode<synchronous>, transform_indices = @transform_3, window_bounds = array<i64: 32, 128>}, {pipeline_mode = #tpu.pipeline_mode<synchronous>, transform_indices = @transform_4, window_bounds = array<i64: 32, 64>}, {pipeline_mode = #tpu.pipeline_mode<synchronous>, transform_indices = @transform_5, window_bounds = array<i64: 64, 32>}, {pipeline_mode = #tpu.pipeline_mode<synchronous>, transform_indices = @transform_6, window_bounds = array<i64: 8, 64>}, {transform_indices = @transform_7, window_bounds = array<i64: 1, 8, 32>}]} {
    %c0 = arith.constant 0 : index
    %c0_0 = arith.constant 0 : index
    %c0_1 = arith.constant 0 : index
    %0 = vector.load %arg1[%c0, %c0_0, %c0_1] : memref<1x8x32xf32, #tpu.memory_space<vmem>>, vector<1x8x32xf32>
    %1 = vector.shape_cast %0 : vector<1x8x32xf32> to vector<8x32xf32>
    %c0_2 = arith.constant 0 : index
    %c0_3 = arith.constant 0 : index
    %2 = vector.load %arg7[%c0_2, %c0_3] : memref<8x64xf32, #tpu.memory_space<vmem>>, vector<8x64xf32>
    %3 = vector.extract_strided_slice %2 {offsets = [0, 0], sizes = [1, 64], strides = [1, 1]} : vector<8x64xf32> to vector<1x64xf32>
    %4 = vector.extract_strided_slice %2 {offsets = [1, 0], sizes = [1, 32], strides = [1, 1]} : vector<8x64xf32> to vector<1x32xf32>
    %5 = vector.extract_strided_slice %2 {offsets = [2, 0], sizes = [1, 64], strides = [1, 1]} : vector<8x64xf32> to vector<1x64xf32>
    %6 = vector.extract_strided_slice %2 {offsets = [3, 0], sizes = [1, 32], strides = [1, 1]} : vector<8x64xf32> to vector<1x32xf32>
    %7 = vector.extract_strided_slice %2 {offsets = [4, 0], sizes = [1, 32], strides = [1, 1]} : vector<8x64xf32> to vector<1x32xf32>
    %8 = vector.extract_strided_slice %2 {offsets = [5, 0], sizes = [1, 32], strides = [1, 1]} : vector<8x64xf32> to vector<1x32xf32>
    %9 = vector.extract_strided_slice %2 {offsets = [6, 0], sizes = [1, 32], strides = [1, 1]} : vector<8x64xf32> to vector<1x32xf32>
    %10 = vector.extract_strided_slice %2 {offsets = [7, 0], sizes = [1, 32], strides = [1, 1]} : vector<8x64xf32> to vector<1x32xf32>
    %c0_4 = arith.constant 0 : index
    %c0_5 = arith.constant 0 : index
    %c0_6 = arith.constant 0 : index
    %11 = vector.load %arg2[%c0_4, %c0_5, %c0_6] : memref<1x1x8xf32, #tpu.memory_space<vmem>>, vector<1x1x8xf32>
    %12 = vector.shape_cast %11 : vector<1x1x8xf32> to vector<1x8xf32>
    %cst = arith.constant 0.000000e+00 : f32
    %13 = vector.broadcast %cst : f32 to vector<1x8xf32>
    %14 = arith.cmpf oeq, %12, %13 : vector<1x8xf32>
    %cst_7 = arith.constant -1.000000e+09 : f32
    %cst_8 = arith.constant 0.000000e+00 : f32
    %15 = vector.broadcast %cst_7 : f32 to vector<1x8xf32>
    %16 = vector.broadcast %cst_8 : f32 to vector<1x8xf32>
    %17 = arith.select %14, %15, %16 : vector<1x8xi1>, vector<1x8xf32>
    %cst_9 = arith.constant dense<0.000000e+00> : vector<8xf32>
    %18 = vector.multi_reduction <add>, %1, %cst_9 [1] : vector<8x32xf32> to vector<8xf32>
    %19 = vector.shape_cast %18 : vector<8xf32> to vector<8x1xf32>
    %cst_10 = arith.constant 3.200000e+01 : f32
    %20 = vector.broadcast %cst_10 : f32 to vector<8x1xf32>
    %21 = arith.divf %19, %20 : vector<8x1xf32>
    %22 = vector.broadcast %21 : vector<8x1xf32> to vector<8x32xf32>
    %23 = arith.subf %1, %22 : vector<8x32xf32>
    %24 = arith.mulf %23, %23 : vector<8x32xf32>
    %cst_11 = arith.constant dense<0.000000e+00> : vector<8xf32>
    %25 = vector.multi_reduction <add>, %24, %cst_11 [1] : vector<8x32xf32> to vector<8xf32>
    %26 = vector.shape_cast %25 : vector<8xf32> to vector<8x1xf32>
    %cst_12 = arith.constant 0.0322580636 : f32
    %27 = vector.broadcast %cst_12 : f32 to vector<8x1xf32>
    %28 = arith.mulf %26, %27 : vector<8x1xf32>
    %29 = math.sqrt %28 : vector<8x1xf32>
    %cst_13 = arith.constant 9.99999997E-7 : f32
    %30 = vector.broadcast %cst_13 : f32 to vector<8x1xf32>
    %31 = arith.addf %29, %30 : vector<8x1xf32>
    %cst_14 = arith.constant 1.000000e+00 : f32
    %32 = vector.broadcast %cst_14 : f32 to vector<8x1xf32>
    %33 = arith.divf %32, %31 : vector<8x1xf32>
    %34 = vector.broadcast %21 : vector<8x1xf32> to vector<8x32xf32>
    %35 = arith.subf %1, %34 : vector<8x32xf32>
    %36 = vector.broadcast %33 : vector<8x1xf32> to vector<8x32xf32>
    %37 = arith.mulf %35, %36 : vector<8x32xf32>
    %38 = vector.broadcast %7 : vector<1x32xf32> to vector<8x32xf32>
    %39 = arith.mulf %38, %37 : vector<8x32xf32>
    %40 = vector.broadcast %8 : vector<1x32xf32> to vector<8x32xf32>
    %41 = arith.addf %39, %40 : vector<8x32xf32>
    %c0_15 = arith.constant 0 : index
    %c0_16 = arith.constant 0 : index
    %42 = vector.load %arg3[%c0_15, %c0_16] : memref<32x64xf32, #tpu.memory_space<vmem>>, vector<32x64xf32>
    %cst_17 = arith.constant dense<0.000000e+00> : vector<8x64xf32>
    %43 = tpu.matmul %41, %42, %cst_17 {dimension_numbers = #tpu.dot_dimension_numbers<[1], [0], [0], [1], [0, 0, 1, 1], [], []>} : vector<8x32xf32>, vector<32x64xf32>, vector<8x64xf32> -> vector<8x64xf32>
    %44 = vector.broadcast %3 : vector<1x64xf32> to vector<8x64xf32>
    %45 = arith.addf %43, %44 : vector<8x64xf32>
    %46 = vector.extract_strided_slice %45 {offsets = [0, 0], sizes = [8, 32], strides = [1, 1]} : vector<8x64xf32> to vector<8x32xf32>
    %47 = vector.extract_strided_slice %45 {offsets = [0, 32], sizes = [8, 32], strides = [1, 1]} : vector<8x64xf32> to vector<8x32xf32>
    %c0_18 = arith.constant 0 : index
    %c0_19 = arith.constant 0 : index
    %48 = vector.load %arg4[%c0_18, %c0_19] : memref<32x128xf32, #tpu.memory_space<vmem>>, vector<32x128xf32>
    %cst_20 = arith.constant dense<0.000000e+00> : vector<8x128xf32>
    %49 = tpu.matmul %41, %48, %cst_20 {dimension_numbers = #tpu.dot_dimension_numbers<[1], [0], [0], [1], [0, 0, 1, 1], [], []>} : vector<8x32xf32>, vector<32x128xf32>, vector<8x128xf32> -> vector<8x128xf32>
    %cst_21 = arith.constant 1.000000e+00 : f32
    %50 = vector.broadcast %cst_21 : f32 to vector<8x1xf32>
    %51 = vector.extract_strided_slice %46 {offsets = [0, 0], sizes = [8, 8], strides = [1, 1]} : vector<8x32xf32> to vector<8x8xf32>
    %52 = vector.extract_strided_slice %47 {offsets = [0, 0], sizes = [8, 8], strides = [1, 1]} : vector<8x32xf32> to vector<8x8xf32>
    %cst_22 = arith.constant dense<0.000000e+00> : vector<8x8xf32>
    %53 = tpu.matmul %51, %52, %cst_22 {dimension_numbers = #tpu.dot_dimension_numbers<[1], [1], [0], [0], [0, 0, 1, 0], [], []>} : vector<8x8xf32>, vector<8x8xf32>, vector<8x8xf32> -> vector<8x8xf32>
    %54 = vector.broadcast %17 : vector<1x8xf32> to vector<8x8xf32>
    %55 = arith.addf %53, %54 : vector<8x8xf32>
    %cst_23 = arith.constant dense<0xFF800000> : vector<8xf32>
    %56 = vector.multi_reduction <maximumf>, %55, %cst_23 [1] : vector<8x8xf32> to vector<8xf32>
    %57 = vector.shape_cast %56 : vector<8xf32> to vector<8x1xf32>
    %58 = vector.broadcast %57 : vector<8x1xf32> to vector<8x8xf32>
    %59 = arith.subf %55, %58 : vector<8x8xf32>
    %60 = math.exp %59 : vector<8x8xf32>
    %cst_24 = arith.constant dense<0.000000e+00> : vector<8x1xf32>
    %61 = tpu.matmul %60, %50, %cst_24 {dimension_numbers = #tpu.dot_dimension_numbers<[1], [0], [0], [1], [0, 0, 1, 1], [], []>} : vector<8x8xf32>, vector<8x1xf32>, vector<8x1xf32> -> vector<8x1xf32>
    %62 = vector.extract_strided_slice %49 {offsets = [0, 0], sizes = [8, 32], strides = [1, 1]} : vector<8x128xf32> to vector<8x32xf32>
    %cst_25 = arith.constant dense<0.000000e+00> : vector<8x32xf32>
    %63 = tpu.matmul %60, %62, %cst_25 {dimension_numbers = #tpu.dot_dimension_numbers<[1], [0], [0], [1], [0, 0, 1, 1], [], []>} : vector<8x8xf32>, vector<8x32xf32>, vector<8x32xf32> -> vector<8x32xf32>
    %64 = tpu.reciprocal %61 {approx = true} : vector<8x1xf32> -> vector<8x1xf32>
    %65 = vector.broadcast %64 : vector<8x1xf32> to vector<8x32xf32>
    %66 = arith.mulf %63, %65 : vector<8x32xf32>
    %67 = vector.broadcast %4 : vector<1x32xf32> to vector<8x32xf32>
    %68 = arith.addf %67, %66 : vector<8x32xf32>
    %69 = vector.extract_strided_slice %46 {offsets = [0, 8], sizes = [8, 8], strides = [1, 1]} : vector<8x32xf32> to vector<8x8xf32>
    %70 = vector.extract_strided_slice %47 {offsets = [0, 8], sizes = [8, 8], strides = [1, 1]} : vector<8x32xf32> to vector<8x8xf32>
    %cst_26 = arith.constant dense<0.000000e+00> : vector<8x8xf32>
    %71 = tpu.matmul %69, %70, %cst_26 {dimension_numbers = #tpu.dot_dimension_numbers<[1], [1], [0], [0], [0, 0, 1, 0], [], []>} : vector<8x8xf32>, vector<8x8xf32>, vector<8x8xf32> -> vector<8x8xf32>
    %72 = vector.broadcast %17 : vector<1x8xf32> to vector<8x8xf32>
    %73 = arith.addf %71, %72 : vector<8x8xf32>
    %cst_27 = arith.constant dense<0xFF800000> : vector<8xf32>
    %74 = vector.multi_reduction <maximumf>, %73, %cst_27 [1] : vector<8x8xf32> to vector<8xf32>
    %75 = vector.shape_cast %74 : vector<8xf32> to vector<8x1xf32>
    %76 = vector.broadcast %75 : vector<8x1xf32> to vector<8x8xf32>
    %77 = arith.subf %73, %76 : vector<8x8xf32>
    %78 = math.exp %77 : vector<8x8xf32>
    %cst_28 = arith.constant dense<0.000000e+00> : vector<8x1xf32>
    %79 = tpu.matmul %78, %50, %cst_28 {dimension_numbers = #tpu.dot_dimension_numbers<[1], [0], [0], [1], [0, 0, 1, 1], [], []>} : vector<8x8xf32>, vector<8x1xf32>, vector<8x1xf32> -> vector<8x1xf32>
    %80 = vector.extract_strided_slice %49 {offsets = [0, 32], sizes = [8, 32], strides = [1, 1]} : vector<8x128xf32> to vector<8x32xf32>
    %cst_29 = arith.constant dense<0.000000e+00> : vector<8x32xf32>
    %81 = tpu.matmul %78, %80, %cst_29 {dimension_numbers = #tpu.dot_dimension_numbers<[1], [0], [0], [1], [0, 0, 1, 1], [], []>} : vector<8x8xf32>, vector<8x32xf32>, vector<8x32xf32> -> vector<8x32xf32>
    %82 = tpu.reciprocal %79 {approx = true} : vector<8x1xf32> -> vector<8x1xf32>
    %83 = vector.broadcast %82 : vector<8x1xf32> to vector<8x32xf32>
    %84 = arith.mulf %81, %83 : vector<8x32xf32>
    %85 = arith.addf %68, %84 : vector<8x32xf32>
    %86 = vector.extract_strided_slice %46 {offsets = [0, 16], sizes = [8, 8], strides = [1, 1]} : vector<8x32xf32> to vector<8x8xf32>
    %87 = vector.extract_strided_slice %47 {offsets = [0, 16], sizes = [8, 8], strides = [1, 1]} : vector<8x32xf32> to vector<8x8xf32>
    %cst_30 = arith.constant dense<0.000000e+00> : vector<8x8xf32>
    %88 = tpu.matmul %86, %87, %cst_30 {dimension_numbers = #tpu.dot_dimension_numbers<[1], [1], [0], [0], [0, 0, 1, 0], [], []>} : vector<8x8xf32>, vector<8x8xf32>, vector<8x8xf32> -> vector<8x8xf32>
    %89 = vector.broadcast %17 : vector<1x8xf32> to vector<8x8xf32>
    %90 = arith.addf %88, %89 : vector<8x8xf32>
    %cst_31 = arith.constant dense<0xFF800000> : vector<8xf32>
    %91 = vector.multi_reduction <maximumf>, %90, %cst_31 [1] : vector<8x8xf32> to vector<8xf32>
    %92 = vector.shape_cast %91 : vector<8xf32> to vector<8x1xf32>
    %93 = vector.broadcast %92 : vector<8x1xf32> to vector<8x8xf32>
    %94 = arith.subf %90, %93 : vector<8x8xf32>
    %95 = math.exp %94 : vector<8x8xf32>
    %cst_32 = arith.constant dense<0.000000e+00> : vector<8x1xf32>
    %96 = tpu.matmul %95, %50, %cst_32 {dimension_numbers = #tpu.dot_dimension_numbers<[1], [0], [0], [1], [0, 0, 1, 1], [], []>} : vector<8x8xf32>, vector<8x1xf32>, vector<8x1xf32> -> vector<8x1xf32>
    %97 = vector.extract_strided_slice %49 {offsets = [0, 64], sizes = [8, 32], strides = [1, 1]} : vector<8x128xf32> to vector<8x32xf32>
    %cst_33 = arith.constant dense<0.000000e+00> : vector<8x32xf32>
    %98 = tpu.matmul %95, %97, %cst_33 {dimension_numbers = #tpu.dot_dimension_numbers<[1], [0], [0], [1], [0, 0, 1, 1], [], []>} : vector<8x8xf32>, vector<8x32xf32>, vector<8x32xf32> -> vector<8x32xf32>
    %99 = tpu.reciprocal %96 {approx = true} : vector<8x1xf32> -> vector<8x1xf32>
    %100 = vector.broadcast %99 : vector<8x1xf32> to vector<8x32xf32>
    %101 = arith.mulf %98, %100 : vector<8x32xf32>
    %102 = arith.addf %85, %101 : vector<8x32xf32>
    %103 = vector.extract_strided_slice %46 {offsets = [0, 24], sizes = [8, 8], strides = [1, 1]} : vector<8x32xf32> to vector<8x8xf32>
    %104 = vector.extract_strided_slice %47 {offsets = [0, 24], sizes = [8, 8], strides = [1, 1]} : vector<8x32xf32> to vector<8x8xf32>
    %cst_34 = arith.constant dense<0.000000e+00> : vector<8x8xf32>
    %105 = tpu.matmul %103, %104, %cst_34 {dimension_numbers = #tpu.dot_dimension_numbers<[1], [1], [0], [0], [0, 0, 1, 0], [], []>} : vector<8x8xf32>, vector<8x8xf32>, vector<8x8xf32> -> vector<8x8xf32>
    %106 = vector.broadcast %17 : vector<1x8xf32> to vector<8x8xf32>
    %107 = arith.addf %105, %106 : vector<8x8xf32>
    %cst_35 = arith.constant dense<0xFF800000> : vector<8xf32>
    %108 = vector.multi_reduction <maximumf>, %107, %cst_35 [1] : vector<8x8xf32> to vector<8xf32>
    %109 = vector.shape_cast %108 : vector<8xf32> to vector<8x1xf32>
    %110 = vector.broadcast %109 : vector<8x1xf32> to vector<8x8xf32>
    %111 = arith.subf %107, %110 : vector<8x8xf32>
    %112 = math.exp %111 : vector<8x8xf32>
    %cst_36 = arith.constant dense<0.000000e+00> : vector<8x1xf32>
    %113 = tpu.matmul %112, %50, %cst_36 {dimension_numbers = #tpu.dot_dimension_numbers<[1], [0], [0], [1], [0, 0, 1, 1], [], []>} : vector<8x8xf32>, vector<8x1xf32>, vector<8x1xf32> -> vector<8x1xf32>
    %114 = vector.extract_strided_slice %49 {offsets = [0, 96], sizes = [8, 32], strides = [1, 1]} : vector<8x128xf32> to vector<8x32xf32>
    %cst_37 = arith.constant dense<0.000000e+00> : vector<8x32xf32>
    %115 = tpu.matmul %112, %114, %cst_37 {dimension_numbers = #tpu.dot_dimension_numbers<[1], [0], [0], [1], [0, 0, 1, 1], [], []>} : vector<8x8xf32>, vector<8x32xf32>, vector<8x32xf32> -> vector<8x32xf32>
    %116 = tpu.reciprocal %113 {approx = true} : vector<8x1xf32> -> vector<8x1xf32>
    %117 = vector.broadcast %116 : vector<8x1xf32> to vector<8x32xf32>
    %118 = arith.mulf %115, %117 : vector<8x32xf32>
    %119 = arith.addf %102, %118 : vector<8x32xf32>
    %120 = arith.addf %1, %119 : vector<8x32xf32>
    %cst_38 = arith.constant dense<0.000000e+00> : vector<8xf32>
    %121 = vector.multi_reduction <add>, %120, %cst_38 [1] : vector<8x32xf32> to vector<8xf32>
    %122 = vector.shape_cast %121 : vector<8xf32> to vector<8x1xf32>
    %cst_39 = arith.constant 3.200000e+01 : f32
    %123 = vector.broadcast %cst_39 : f32 to vector<8x1xf32>
    %124 = arith.divf %122, %123 : vector<8x1xf32>
    %125 = vector.broadcast %124 : vector<8x1xf32> to vector<8x32xf32>
    %126 = arith.subf %120, %125 : vector<8x32xf32>
    %127 = arith.mulf %126, %126 : vector<8x32xf32>
    %cst_40 = arith.constant dense<0.000000e+00> : vector<8xf32>
    %128 = vector.multi_reduction <add>, %127, %cst_40 [1] : vector<8x32xf32> to vector<8xf32>
    %129 = vector.shape_cast %128 : vector<8xf32> to vector<8x1xf32>
    %cst_41 = arith.constant 0.0322580636 : f32
    %130 = vector.broadcast %cst_41 : f32 to vector<8x1xf32>
    %131 = arith.mulf %129, %130 : vector<8x1xf32>
    %132 = math.sqrt %131 : vector<8x1xf32>
    %cst_42 = arith.constant 9.99999997E-7 : f32
    %133 = vector.broadcast %cst_42 : f32 to vector<8x1xf32>
    %134 = arith.addf %132, %133 : vector<8x1xf32>
    %cst_43 = arith.constant 1.000000e+00 : f32
    %135 = vector.broadcast %cst_43 : f32 to vector<8x1xf32>
    %136 = arith.divf %135, %134 : vector<8x1xf32>
    %137 = vector.broadcast %124 : vector<8x1xf32> to vector<8x32xf32>
    %138 = arith.subf %120, %137 : vector<8x32xf32>
    %139 = vector.broadcast %136 : vector<8x1xf32> to vector<8x32xf32>
    %140 = arith.mulf %138, %139 : vector<8x32xf32>
    %141 = vector.broadcast %9 : vector<1x32xf32> to vector<8x32xf32>
    %142 = arith.mulf %141, %140 : vector<8x32xf32>
    %143 = vector.broadcast %10 : vector<1x32xf32> to vector<8x32xf32>
    %144 = arith.addf %142, %143 : vector<8x32xf32>
    %c0_44 = arith.constant 0 : index
    %c0_45 = arith.constant 0 : index
    %145 = vector.load %arg5[%c0_44, %c0_45] : memref<32x64xf32, #tpu.memory_space<vmem>>, vector<32x64xf32>
    %cst_46 = arith.constant dense<0.000000e+00> : vector<8x64xf32>
    %146 = tpu.matmul %144, %145, %cst_46 {dimension_numbers = #tpu.dot_dimension_numbers<[1], [0], [0], [1], [0, 0, 1, 1], [], []>} : vector<8x32xf32>, vector<32x64xf32>, vector<8x64xf32> -> vector<8x64xf32>
    %147 = vector.broadcast %5 : vector<1x64xf32> to vector<8x64xf32>
    %148 = arith.addf %146, %147 : vector<8x64xf32>
    %cst_47 = arith.constant 0.000000e+00 : f32
    %149 = vector.broadcast %cst_47 : f32 to vector<8x64xf32>
    %150 = arith.maximumf %148, %149 : vector<8x64xf32>
    %c0_48 = arith.constant 0 : index
    %c0_49 = arith.constant 0 : index
    %151 = vector.load %arg6[%c0_48, %c0_49] : memref<64x32xf32, #tpu.memory_space<vmem>>, vector<64x32xf32>
    %cst_50 = arith.constant dense<0.000000e+00> : vector<8x32xf32>
    %152 = tpu.matmul %150, %151, %cst_50 {dimension_numbers = #tpu.dot_dimension_numbers<[1], [0], [0], [1], [0, 0, 1, 1], [], []>} : vector<8x64xf32>, vector<64x32xf32>, vector<8x32xf32> -> vector<8x32xf32>
    %153 = vector.broadcast %6 : vector<1x32xf32> to vector<8x32xf32>
    %154 = arith.addf %152, %153 : vector<8x32xf32>
    %155 = arith.addf %120, %154 : vector<8x32xf32>
    %156 = vector.shape_cast %155 : vector<8x32xf32> to vector<1x8x32xf32>
    %c0_51 = arith.constant 0 : index
    %c0_52 = arith.constant 0 : index
    %c0_53 = arith.constant 0 : index
    %157 = vector.load %arg8[%c0_51, %c0_52, %c0_53] : memref<1x8x32xf32, #tpu.memory_space<vmem>>, vector<1x8x32xf32>
    tpu.vector_store %arg8[%c0_51, %c0_52, %c0_53], %156 {strides = array<i32>} : memref<1x8x32xf32, #tpu.memory_space<vmem>>, vector<1x8x32xf32>,
    return
  }
  func.func @transform_0(%arg0: i32) -> (i32, i32, i32) {
    %c0_i32 = arith.constant 0 : i32
    %c0_i32_0 = arith.constant 0 : i32
    %c0_i32_1 = arith.constant 0 : i32
    return %arg0, %c0_i32, %c0_i32_0 : i32, i32, i32
  }
  func.func @transform_1(%arg0: i32) -> (i32, i32, i32) {
    %c0_i32 = arith.constant 0 : i32
    %c0_i32_0 = arith.constant 0 : i32
    %c0_i32_1 = arith.constant 0 : i32
    return %arg0, %c0_i32, %c0_i32_0 : i32, i32, i32
  }
  func.func @transform_2(%arg0: i32) -> (i32, i32) {
    %c0_i32 = arith.constant 0 : i32
    %c0_i32_0 = arith.constant 0 : i32
    %c0_i32_1 = arith.constant 0 : i32
    return %c0_i32, %c0_i32_0 : i32, i32
  }
  func.func @transform_3(%arg0: i32) -> (i32, i32) {
    %c0_i32 = arith.constant 0 : i32
    %c0_i32_0 = arith.constant 0 : i32
    %c0_i32_1 = arith.constant 0 : i32
    return %c0_i32, %c0_i32_0 : i32, i32
  }
  func.func @transform_4(%arg0: i32) -> (i32, i32) {
    %c0_i32 = arith.constant 0 : i32
    %c0_i32_0 = arith.constant 0 : i32
    %c0_i32_1 = arith.constant 0 : i32
    return %c0_i32, %c0_i32_0 : i32, i32
  }
  func.func @transform_5(%arg0: i32) -> (i32, i32) {
    %c0_i32 = arith.constant 0 : i32
    %c0_i32_0 = arith.constant 0 : i32
    %c0_i32_1 = arith.constant 0 : i32
    return %c0_i32, %c0_i32_0 : i32, i32
  }
  func.func @transform_6(%arg0: i32) -> (i32, i32) {
    %c0_i32 = arith.constant 0 : i32
    %c0_i32_0 = arith.constant 0 : i32
    %c0_i32_1 = arith.constant 0 : i32
    return %c0_i32, %c0_i32_0 : i32, i32
  }
  func.func @transform_7(%arg0: i32) -> (i32, i32, i32) {
    %c0_i32 = arith.constant 0 : i32
    %c0_i32_0 = arith.constant 0 : i32
    %c0_i32_1 = arith.constant 0 : i32
    return %arg0, %c0_i32, %c0_i32_0 : i32, i32, i32
  }
}

</mosaic_0001>

<llo_original>
// kernel: encoder_layer.1
$region0: #{encoder_layer.1}
  #allocation0 [shape = 'u32[]', space=smem, size = 0x4, offset = 0x4, fixed_abs, tag = 'smem constant byte address 0x4 - core index']
  #allocation1 [shape = 'u32[144,128]{1,0:T(1,128)}', space=vmem, size = 0x12000, scoped, tag = 'internal scratch']
  %s0 = inlined_call_operand.vmem [shape: f32[2,8,32], index: 0, kind: input, shape index: {}]
  %s1 = inlined_call_operand.vmem [shape: f32[2,1,8], index: 1, kind: input, shape index: {}]
  %s2 = inlined_call_operand.vmem [shape: f32[32,64], index: 2, kind: input, shape index: {}]
  %s3 = inlined_call_operand.vmem [shape: f32[32,128], index: 3, kind: input, shape index: {}]
  %s4 = inlined_call_operand.vmem [shape: f32[32,64], index: 4, kind: input, shape index: {}]
  %s5 = inlined_call_operand.vmem [shape: f32[64,32], index: 5, kind: input, shape index: {}]
  %s6 = inlined_call_operand.vmem [shape: f32[8,64], index: 6, kind: input, shape index: {}]
  %s7 = inlined_call_operand.hbm [shape: f32[2,8,32], index: 7, kind: output, shape index: {}]
  %s8 = sld [smem:[#allocation0]]
  $region61: #{encoder_layer.1} parent=0
    _
  %s10 = ssub.s32 1, %s8
  %s11 = scalar_select 0, %s10, %s8
  $region1: #{encoder_layer.1} parent=0
    #allocation2 [shape = 'u8[8192]{0}', space=vmem, size = 0x2000, scoped, tag = 'output window, operand 0']
    #allocation3 [shape = 's32[2]{0}', space=sflag, size = 0x8, scoped, tag = 'scoped memory for encoder_layer.1']
    %12 = vsyncpa [#allocation3], 0
    %s13 = scalar_lea.sflag [#allocation3], 1
    %14 = vsyncpa %s13, 0
    loop: start=0, step=1, limit=4
    $region2: #{encoder_layer.1} parent=1 // loop_pre_header
      _
    $region3: #{encoder_layer.1} parent=1 // loop_header
      %s16 = sphi 0, %s20
      %p17 = scmp.ge.s32.totalorder %s16, 4
      %s26 = sphi 0, %s28
      %s29 = sphi 0, %s26
      %s30 = sphi 0, %s29
      %s46 = sphi 0, %s30
      %s52 = sphi 0, %s54
      %s55 = sphi 0, %s52
      %s56 = sphi 0, %s55
      %s72 = sphi 0, %s56
      %s76 = sphi 0, %s76
      %s78 = sphi 0, %s76
      %s79 = sphi 0, %s78
      %s93 = sphi 0, %s79
      %s97 = sphi 0, %s97
      %s99 = sphi 0, %s97
      %s100 = sphi 0, %s99
      %s114 = sphi 0, %s100
      %s118 = sphi 0, %s118
      %s120 = sphi 0, %s118
      %s121 = sphi 0, %s120
      %s135 = sphi 0, %s121
      %s139 = sphi 0, %s139
      %s141 = sphi 0, %s139
      %s142 = sphi 0, %s141
      %s156 = sphi 0, %s142
      %s160 = sphi 0, %s160
      %s162 = sphi 0, %s160
      %s163 = sphi 0, %s162
      %s177 = sphi 0, %s163
      %s183 = sphi 0, %s185
      %s186 = sphi 0, %s183
      %s187 = sphi 0, %s186
      %s203 = sphi 0, %s187
    $region4: #{encoder_layer.1} parent=1 // loop_header_branch
      %19 = sbr.rel (%p17) target = $region8
    $region5: #{encoder_layer.1} parent=1 // loop_body
      %s21 = ssub.s32 %s16, 1
      %s22 = ssub.s32 %s16, 2
      %s23 = sadd.s32 %s16, 1
      %s24 = ssub.s32 %s16, %s23
      %p25 = scmp.eq.s32.totalorder %s24, 0
      %s27 = sadd.s32 %s26, 1
      %s28 = scalar_select %p25, %s26, %s27
      %p31 = pneg %p25
      %p32 = scmp.eq.s32.totalorder %s16, 1
      %p33 = por %p31, %p32
      %p34 = scmp.ne.s32.totalorder %s26, %s29
      %p35 = scmp.eq.s32.totalorder %s16, 0
      %p36 = por %p34, %p35
      %p37 = scmp.ne.s32.totalorder %s26, %s29
      %p38 = scmp.eq.s32.totalorder %s21, 1
      %p39 = por %p37, %p38
      %p40 = scmp.ne.s32.totalorder %s29, %s30
      %p41 = scmp.eq.s32.totalorder %s21, 0
      %p42 = por %p40, %p41
      %p43 = scmp.ne.s32.totalorder %s29, %s30
      %p44 = scmp.eq.s32.totalorder %s22, 1
      %p45 = por %p43, %p44
      %p47 = scmp.ne.s32.totalorder %s30, %s46
      %p48 = scmp.eq.s32.totalorder %s22, 0
      %p49 = por %p47, %p48
      %s50 = ssub.s32 %s16, %s23
      %p51 = scmp.eq.s32.totalorder %s50, 0
      %s53 = sadd.s32 %s52, 1
      %s54 = scalar_select %p51, %s52, %s53
      %p57 = pneg %p51
      %p58 = scmp.eq.s32.totalorder %s16, 1
      %p59 = por %p57, %p58
      %p60 = scmp.ne.s32.totalorder %s52, %s55
      %p61 = scmp.eq.s32.totalorder %s16, 0
      %p62 = por %p60, %p61
      %p63 = scmp.ne.s32.totalorder %s52, %s55
      %p64 = scmp.eq.s32.totalorder %s21, 1
      %p65 = por %p63, %p64
      %p66 = scmp.ne.s32.totalorder %s55, %s56
      %p67 = scmp.eq.s32.totalorder %s21, 0
      %p68 = por %p66, %p67
      %p69 = scmp.ne.s32.totalorder %s55, %s56
      %p70 = scmp.eq.s32.totalorder %s22, 1
      %p71 = por %p69, %p70
      %p73 = scmp.ne.s32.totalorder %s56, %s72
      %p74 = scmp.eq.s32.totalorder %s22, 0
      %p75 = por %p73, %p74
      %s77 = sadd.s32 %s76, 1
      %p80 = scmp.eq.s32.totalorder %s16, 1
      %p81 = scmp.ne.s32.totalorder %s76, %s78
      %p82 = scmp.eq.s32.totalorder %s16, 0
      %p83 = por %p81, %p82
      %p84 = scmp.ne.s32.totalorder %s76, %s78
      %p85 = scmp.eq.s32.totalorder %s21, 1
      %p86 = por %p84, %p85
      %p87 = scmp.ne.s32.totalorder %s78, %s79
      %p88 = scmp.eq.s32.totalorder %s21, 0
      %p89 = por %p87, %p88
      %p90 = scmp.ne.s32.totalorder %s78, %s79
      %p91 = scmp.eq.s32.totalorder %s22, 1
      %p92 = por %p90, %p91
      %p94 = scmp.ne.s32.totalorder %s79, %s93
      %p95 = scmp.eq.s32.totalorder %s22, 0
      %p96 = por %p94, %p95
      %s98 = sadd.s32 %s97, 1
      %p101 = scmp.eq.s32.totalorder %s16, 1
      %p102 = scmp.ne.s32.totalorder %s97, %s99
      %p103 = scmp.eq.s32.totalorder %s16, 0
      %p104 = por %p102, %p103
      %p105 = scmp.ne.s32.totalorder %s97, %s99
      %p106 = scmp.eq.s32.totalorder %s21, 1
      %p107 = por %p105, %p106
      %p108 = scmp.ne.s32.totalorder %s99, %s100
      %p109 = scmp.eq.s32.totalorder %s21, 0
      %p110 = por %p108, %p109
      %p111 = scmp.ne.s32.totalorder %s99, %s100
      %p112 = scmp.eq.s32.totalorder %s22, 1
      %p113 = por %p111, %p112
      %p115 = scmp.ne.s32.totalorder %s100, %s114
      %p116 = scmp.eq.s32.totalorder %s22, 0
      %p117 = por %p115, %p116
      %s119 = sadd.s32 %s118, 1
      %p122 = scmp.eq.s32.totalorder %s16, 1
      %p123 = scmp.ne.s32.totalorder %s118, %s120
      %p124 = scmp.eq.s32.totalorder %s16, 0
      %p125 = por %p123, %p124
      %p126 = scmp.ne.s32.totalorder %s118, %s120
      %p127 = scmp.eq.s32.totalorder %s21, 1
      %p128 = por %p126, %p127
      %p129 = scmp.ne.s32.totalorder %s120, %s121
      %p130 = scmp.eq.s32.totalorder %s21, 0
      %p131 = por %p129, %p130
      %p132 = scmp.ne.s32.totalorder %s120, %s121
      %p133 = scmp.eq.s32.totalorder %s22, 1
      %p134 = por %p132, %p133
      %p136 = scmp.ne.s32.totalorder %s121, %s135
      %p137 = scmp.eq.s32.totalorder %s22, 0
      %p138 = por %p136, %p137
      %s140 = sadd.s32 %s139, 1
      %p143 = scmp.eq.s32.totalorder %s16, 1
      %p144 = scmp.ne.s32.totalorder %s139, %s141
      %p145 = scmp.eq.s32.totalorder %s16, 0
      %p146 = por %p144, %p145
      %p147 = scmp.ne.s32.totalorder %s139, %s141
      %p148 = scmp.eq.s32.totalorder %s21, 1
      %p149 = por %p147, %p148
      %p150 = scmp.ne.s32.totalorder %s141, %s142
      %p151 = scmp.eq.s32.totalorder %s21, 0
      %p152 = por %p150, %p151
      %p153 = scmp.ne.s32.totalorder %s141, %s142
      %p154 = scmp.eq.s32.totalorder %s22, 1
      %p155 = por %p153, %p154
      %p157 = scmp.ne.s32.totalorder %s142, %s156
      %p158 = scmp.eq.s32.totalorder %s22, 0
      %p159 = por %p157, %p158
      %s161 = sadd.s32 %s160, 1
      %p164 = scmp.eq.s32.totalorder %s16, 1
      %p165 = scmp.ne.s32.totalorder %s160, %s162
      %p166 = scmp.eq.s32.totalorder %s16, 0
      %p167 = por %p165, %p166
      %p168 = scmp.ne.s32.totalorder %s160, %s162
      %p169 = scmp.eq.s32.totalorder %s21, 1
      %p170 = por %p168, %p169
      %p171 = scmp.ne.s32.totalorder %s162, %s163
      %p172 = scmp.eq.s32.totalorder %s21, 0
      %p173 = por %p171, %p172
      %p174 = scmp.ne.s32.totalorder %s162, %s163
      %p175 = scmp.eq.s32.totalorder %s22, 1
      %p176 = por %p174, %p175
      %p178 = scmp.ne.s32.totalorder %s163, %s177
      %p179 = scmp.eq.s32.totalorder %s22, 0
      %p180 = por %p178, %p179
      %s181 = ssub.s32 %s16, %s23
      %p182 = scmp.eq.s32.totalorder %s181, 0
      %s184 = sadd.s32 %s183, 1
      %s185 = scalar_select %p182, %s183, %s184
      %p188 = pneg %p182
      %p189 = scmp.eq.s32.totalorder %s16, 1
      %p190 = por %p188, %p189
      %p191 = scmp.ne.s32.totalorder %s183, %s186
      %p192 = scmp.eq.s32.totalorder %s16, 0
      %p193 = por %p191, %p192
      %p194 = scmp.ne.s32.totalorder %s183, %s186
      %p195 = scmp.eq.s32.totalorder %s21, 1
      %p196 = por %p194, %p195
      %p197 = scmp.ne.s32.totalorder %s186, %s187
      %p198 = scmp.eq.s32.totalorder %s21, 0
      %p199 = por %p197, %p198
      %p200 = scmp.ne.s32.totalorder %s186, %s187
      %p201 = scmp.eq.s32.totalorder %s22, 1
      %p202 = por %p200, %p201
      %p204 = scmp.ne.s32.totalorder %s187, %s203
      %p205 = scmp.eq.s32.totalorder %s22, 0
      %p206 = por %p204, %p205
      %p207 = scmp.le.s32.totalorder 1, %s16
      %p208 = scmp.lt.s32.totalorder %s16, 3
      %p209 = pnand %p207, %p208
      %p210 = pneg %p209
      // Predicated region
      $region9: #{encoder_layer.1} parent=5 // pred_check
        _
      $region10: #{encoder_layer.1} parent=5 // pred_check_branch
        %212 = sbr.rel (%p209) target = $region12
      $region11: #{encoder_layer.1} parent=5 // pred_region
        %s213 = ssub.s32 %s16, 1
        // Predicated region
        $region13: #{encoder_layer.1} parent=11 // pred_check
          %p214 = pneg %p89
        $region14: #{encoder_layer.1} parent=11 // pred_check_branch
          %216 = sbr.rel (%p214) target = $region16
        $region15: #{encoder_layer.1} parent=11 // pred_region
          _
        $region16: #{encoder_layer.1} parent=11 // pred_fallthru
          _
        // Predicated region
        $region17: #{encoder_layer.1} parent=11 // pred_check
          %p217 = pneg %p110
        $region18: #{encoder_layer.1} parent=11 // pred_check_branch
          %219 = sbr.rel (%p217) target = $region20
        $region19: #{encoder_layer.1} parent=11 // pred_region
          _
        $region20: #{encoder_layer.1} parent=11 // pred_fallthru
          _
        // Predicated region
        $region21: #{encoder_layer.1} parent=11 // pred_check
          %p220 = pneg %p131
        $region22: #{encoder_layer.1} parent=11 // pred_check_branch
          %222 = sbr.rel (%p220) target = $region24
        $region23: #{encoder_layer.1} parent=11 // pred_region
          _
        $region24: #{encoder_layer.1} parent=11 // pred_fallthru
          _
        // Predicated region
        $region25: #{encoder_layer.1} parent=11 // pred_check
          %p223 = pneg %p152
        $region26: #{encoder_layer.1} parent=11 // pred_check_branch
          %225 = sbr.rel (%p223) target = $region28
        $region27: #{encoder_layer.1} parent=11 // pred_region
          _
        $region28: #{encoder_layer.1} parent=11 // pred_fallthru
          _
        // Predicated region
        $region29: #{encoder_layer.1} parent=11 // pred_check
          %p226 = pneg %p173
        $region30: #{encoder_layer.1} parent=11 // pred_check_branch
          %228 = sbr.rel (%p226) target = $region32
        $region31: #{encoder_layer.1} parent=11 // pred_region
          _
        $region32: #{encoder_layer.1} parent=11 // pred_fallthru
          _
      $region12: #{encoder_layer.1} parent=5 // pred_fallthru
        _
      %p229 = scmp.lt.s32.totalorder %s16, 2
      // Predicated region
      $region33: #{encoder_layer.1} parent=5 // pred_check
        %p230 = pneg %p229
      $region34: #{encoder_layer.1} parent=5 // pred_check_branch
        %232 = sbr.rel (%p230) target = $region36
      $region35: #{encoder_layer.1} parent=5 // pred_region
        // Predicated region
        $region37: #{encoder_layer.1} parent=35 // pred_check
          %p233 = pneg %p36
        $region38: #{encoder_layer.1} parent=35 // pred_check_branch
          %235 = sbr.rel (%p233) target = $region40
        $region39: #{encoder_layer.1} parent=35 // pred_region
          %p236 = scmp.lt.s32.totalorder %s16, 1
          %s237 = scalar_select %p236, %s16, 1
          %s238 = smul.addr %s237, 8
          %s239 = scalar_lea.vmem %s0, %s238
        $region40: #{encoder_layer.1} parent=35 // pred_fallthru
          _
        // Predicated region
        $region41: #{encoder_layer.1} parent=35 // pred_check
          %p240 = pneg %p62
        $region42: #{encoder_layer.1} parent=35 // pred_check_branch
          %242 = sbr.rel (%p240) target = $region44
        $region43: #{encoder_layer.1} parent=35 // pred_region
          %p243 = scmp.lt.s32.totalorder %s16, 1
          %s244 = scalar_select %p243, %s16, 1
          %s245 = scalar_lea.vmem %s1, %s244
        $region44: #{encoder_layer.1} parent=35 // pred_fallthru
          _
      $region36: #{encoder_layer.1} parent=5 // pred_fallthru
        _
      %p246 = scmp.le.s32.totalorder 1, %s16
      %p247 = scmp.lt.s32.totalorder %s16, 3
      %p248 = pnand %p246, %p247
      %p249 = pneg %p248
      // Predicated region
      $region45: #{encoder_layer.1} parent=5 // pred_check
        _
      $region46: #{encoder_layer.1} parent=5 // pred_check_branch
        %251 = sbr.rel (%p248) target = $region48
      $region47: #{encoder_layer.1} parent=5 // pred_region
        %s252 = ssub.s32 %s16, 1
        %p253 = scmp.lt.s32.totalorder %s21, 1
        %s254 = scalar_select %p253, %s21, 1
        %s255 = smul.addr %s254, 8
        %s256 = scalar_lea.vmem %s0, %s255
        %p257 = pneg %p42
        %p258 = pneg %p39
        %p259 = scmp.lt.s32.totalorder %s21, 1
        %s260 = scalar_select %p259, %s21, 1
        %s261 = scalar_lea.vmem %s1, %s260
        %p262 = pneg %p68
        %p263 = pneg %p65
        %p264 = pneg %p89
        %p265 = pneg %p86
        %p266 = pneg %p110
        %p267 = pneg %p107
        %p268 = pneg %p131
        %p269 = pneg %p128
        %p270 = pneg %p152
        %p271 = pneg %p149
        %p272 = pneg %p173
        %p273 = pneg %p170
        %p274 = pneg %p199
        %p275 = pneg %p196
        %s276 = sand.u32 %s186, 1
        %s277 = scalar_lea.sflag [#allocation3], %s276
        %s278 = sand.u32 %s186, 1
        %s279 = smul.addr %s278, 8
        %s280 = scalar_lea.vmem [#allocation2], %s279
        %p281 = scmp.lt.s32.totalorder %s21, 1
        %s282 = scalar_select %p281, %s21, 1
        %s283 = smul.addr %s282, 8
        %s284 = scalar_lea.vmem %s0, %s283
        %p285 = scmp.lt.s32.totalorder %s21, 1
        %s286 = scalar_select %p285, %s21, 1
        %s287 = scalar_lea.vmem %s1, %s286
        %v288 = vld [vmem:[%s284] sm:$0xff]
        %v289 = vld [vmem:[%s6] sm:$0xff]
        %v290 = vld [vmem:[%s287] sm:$0x1]
        %vm291 = vcmp.eq.f32.partialorder %v290, 0.0
        %v292 = vsel %vm291, -1e+09, 0.0
        %vm293 = vcmask 261120
        %v294 = vsel %vm293, %v288, 0.0
        %295 = vadd.xlane.f32.xlu0 %v294
        %v296 = vpop.xlane.xlu0 %295
        %v297 = vrcp.pop 32.0
        %v298 = vmul.f32 %v296, %v297
        %v299 = vsub.f32 %v288, %v298
        %v300 = vmul.f32 %v299, %v299
        %v301 = vsel %vm293, %v300, 0.0
        %302 = vadd.xlane.f32.xlu0 %v301
        %v303 = vpop.xlane.xlu0 %302
        %v304 = vmul.f32 %v303, 0.032258064
        %v305 = vrsqrt.pop %v304
        %v306 = vmul.f32 %v304, %v305
        %vm307 = vcmp.eq.f32.partialorder %v304, inf
        %v308 = vsel %vm307, %v304, %v306
        %vm309 = vcmp.eq.f32.partialorder %v304, 0.0
        %v310 = vand.u32 %v304, 2147483648
        %v311 = vsel %vm309, %v310, %v308
        %v312 = vadd.f32 %v311, 1e-06
        %v313 = vrcp.pop %v312
        %v314 = vmul.f32 1.0, %v313
        %v315 = vmul.f32 %v299, %v314
        %v316 = vlaneseq
        %v317 = vshrl.u32 %v316, 7
        %v318 = vsub.s32 4, %v317
        %v319 = vrot.slane %v289, %v318
        %v320 = vmul.f32 %v319, %v315
        %v321 = vlaneseq
        %v322 = vshrl.u32 %v321, 7
        %v323 = vsub.s32 5, %v322
        %v324 = vrot.slane %v289, %v323
        %v325 = vadd.f32 %v320, %v324
        %v326 = vld [vmem:[%s2] sm:$0xff]
        %v327 = vld [vmem:[%s2 + $0x8] sm:$0xff]
        %v328 = vld [vmem:[%s2 + $0x10] sm:$0xff]
        %v329 = vld [vmem:[%s2 + $0x18] sm:$0xff]
        %v330 = vlaneseq
        %v331 = vshrl.u32 %v330, 7
        %v332 = vsub.s32 0, %v331
        %v333 = vrot.slane %v289, %v332
        %v335 = vsel %vm293, %v325, 0
        %337 = vmatprep.subr.mxu0 0.0
        %338 = vmatpush1.msra.mxu0 %v326
        %339 = vmatprep.subr.mxu0 0.0
        %340 = vmatpush1.msra.mxu0 %v327
        %341 = vmatprep.subr.mxu0 0.0
        %342 = vmatpush1.msra.mxu0 %v328
        %343 = vmatprep.subr.mxu0 0.0
        %344 = vmatpush1.msra.mxu0 %v329
        %345 = vmatprep.subr.mxu0 0.0
        %346 = vmatpush1.msra.mxu0 0.0
        %347 = vmatprep.subr.mxu0 0.0
        %348 = vmatpush1.msra.mxu0 0.0
        %349 = vmatprep.subr.mxu0 0.0
        %350 = vmatpush1.msra.mxu0 0.0
        %351 = vmatprep.subr.mxu0 0.0
        %352 = vmatpush1.msra.mxu0 0.0
        %353 = vmatprep.subr.mxu0 0.0
        %354 = vmatpush1.msra.mxu0 0.0
        %355 = vmatprep.subr.mxu0 0.0
        %356 = vmatpush1.msra.mxu0 0.0
        %357 = vmatprep.subr.mxu0 0.0
        %358 = vmatpush1.msra.mxu0 0.0
        %359 = vmatprep.subr.mxu0 0.0
        %360 = vmatpush1.msra.mxu0 0.0
        %361 = vmatprep.subr.mxu0 0.0
        %362 = vmatpush1.msra.mxu0 0.0
        %363 = vmatprep.subr.mxu0 0.0
        %364 = vmatpush1.msra.mxu0 0.0
        %365 = vmatprep.subr.mxu0 0.0
        %366 = vmatpush1.msra.mxu0 0.0
        %367 = vmatprep.subr.mxu0 0.0
        %368 = vmatpush1.msra.mxu0 0.0
        %369 = vmatprep.subr.mxu0 0.0
        %370 = vmatpush1.msra.mxu0 0.0
        %371 = vmatprep.subr.mxu0 0.0
        %372 = vmatpush1.msra.mxu0 0.0
        %373 = vmatprep.subr.mxu0 0.0
        %374 = vmatpush1.msra.mxu0 0.0
        %375 = vmatprep.subr.mxu0 0.0
        %376 = vmatpush1.msra.mxu0 0.0
        %377 = vmatprep.subr.mxu0 0.0
        %378 = vmatpush1.msra.mxu0 0.0
        %379 = vmatprep.subr.mxu0 0.0
        %380 = vmatpush1.msra.mxu0 0.0
        %381 = vmatprep.subr.mxu0 0.0
        %382 = vmatpush1.msra.mxu0 0.0
        %383 = vmatprep.subr.mxu0 0.0
        %384 = vmatpush1.msra.mxu0 0.0
        %385 = vmatprep.subr.mxu0 0.0
        %386 = vmatpush1.msra.mxu0 0.0
        %387 = vmatprep.subr.mxu0 0.0
        %388 = vmatpush1.msra.mxu0 0.0
        %389 = vmatprep.subr.mxu0 0.0
        %390 = vmatpush1.msra.mxu0 0.0
        %391 = vmatprep.subr.mxu0 0.0
        %392 = vmatpush1.msra.mxu0 0.0
        %393 = vmatprep.subr.mxu0 0.0
        %394 = vmatpush1.msra.mxu0 0.0
        %395 = vmatprep.subr.mxu0 0.0
        %396 = vmatpush1.msra.mxu0 0.0
        %397 = vmatprep.subr.mxu0 0.0
        %398 = vmatpush1.msra.mxu0 0.0
        %399 = vmatprep.subr.mxu0 0.0
        %400 = vmatpush1.msra.mxu0 0.0
        %401 = vmatprep.mubr.f32.mxu0 0.0
        %402 = vmatmul.mubr.f32.gmra.mrb[0].mxu0 %v335
        %v403 = vpop.f32.mrb[0].mxu0
        %v404 = vadd.f32 %v333, %v403
        %v405 = vpop.f32.mrb[0].mxu0
        %406 = vdwg.mxu0
        %v407 = vld [vmem:[%s3] sm:$0xff]
        %v408 = vld [vmem:[%s3 + $0x8] sm:$0xff]
        %v409 = vld [vmem:[%s3 + $0x10] sm:$0xff]
        %v410 = vld [vmem:[%s3 + $0x18] sm:$0xff]
        %411 = vmatprep.subr.mxu0 0.0
        %412 = vmatpush1.msra.mxu0 %v407
        %413 = vmatprep.subr.mxu0 0.0
        %414 = vmatpush1.msra.mxu0 %v408
        %415 = vmatprep.subr.mxu0 0.0
        %416 = vmatpush1.msra.mxu0 %v409
        %417 = vmatprep.subr.mxu0 0.0
        %418 = vmatpush1.msra.mxu0 %v410
        %419 = vmatprep.subr.mxu0 0.0
        %420 = vmatpush1.msra.mxu0 0.0
        %421 = vmatprep.subr.mxu0 0.0
        %422 = vmatpush1.msra.mxu0 0.0
        %423 = vmatprep.subr.mxu0 0.0
        %424 = vmatpush1.msra.mxu0 0.0
        %425 = vmatprep.subr.mxu0 0.0
        %426 = vmatpush1.msra.mxu0 0.0
        %427 = vmatprep.subr.mxu0 0.0
        %428 = vmatpush1.msra.mxu0 0.0
        %429 = vmatprep.subr.mxu0 0.0
        %430 = vmatpush1.msra.mxu0 0.0
        %431 = vmatprep.subr.mxu0 0.0
        %432 = vmatpush1.msra.mxu0 0.0
        %433 = vmatprep.subr.mxu0 0.0
        %434 = vmatpush1.msra.mxu0 0.0
        %435 = vmatprep.subr.mxu0 0.0
        %436 = vmatpush1.msra.mxu0 0.0
        %437 = vmatprep.subr.mxu0 0.0
        %438 = vmatpush1.msra.mxu0 0.0
        %439 = vmatprep.subr.mxu0 0.0
        %440 = vmatpush1.msra.mxu0 0.0
        %441 = vmatprep.subr.mxu0 0.0
        %442 = vmatpush1.msra.mxu0 0.0
        %443 = vmatprep.subr.mxu0 0.0
        %444 = vmatpush1.msra.mxu0 0.0
        %445 = vmatprep.subr.mxu0 0.0
        %446 = vmatpush1.msra.mxu0 0.0
        %447 = vmatprep.subr.mxu0 0.0
        %448 = vmatpush1.msra.mxu0 0.0
        %449 = vmatprep.subr.mxu0 0.0
        %450 = vmatpush1.msra.mxu0 0.0
        %451 = vmatprep.subr.mxu0 0.0
        %452 = vmatpush1.msra.mxu0 0.0
        %453 = vmatprep.subr.mxu0 0.0
        %454 = vmatpush1.msra.mxu0 0.0
        %455 = vmatprep.subr.mxu0 0.0
        %456 = vmatpush1.msra.mxu0 0.0
        %457 = vmatprep.subr.mxu0 0.0
        %458 = vmatpush1.msra.mxu0 0.0
        %459 = vmatprep.subr.mxu0 0.0
        %460 = vmatpush1.msra.mxu0 0.0
        %461 = vmatprep.subr.mxu0 0.0
        %462 = vmatpush1.msra.mxu0 0.0
        %463 = vmatprep.subr.mxu0 0.0
        %464 = vmatpush1.msra.mxu0 0.0
        %465 = vmatprep.subr.mxu0 0.0
        %466 = vmatpush1.msra.mxu0 0.0
        %467 = vmatprep.subr.mxu0 0.0
        %468 = vmatpush1.msra.mxu0 0.0
        %469 = vmatprep.subr.mxu0 0.0
        %470 = vmatpush1.msra.mxu0 0.0
        %471 = vmatprep.subr.mxu0 0.0
        %472 = vmatpush1.msra.mxu0 0.0
        %473 = vmatprep.subr.mxu0 0.0
        %474 = vmatpush1.msra.mxu0 0.0
        %475 = vmatprep.mubr.f32.mxu0 0.0
        %476 = vmatmul.mubr.f32.gmra.mrb[0].mxu0 %v335
        %v477 = vpop.f32.mrb[0].mxu0
        %v478 = vadd.f32 0.0, %v477
        %v479 = vpop.f32.mrb[0].mxu0
        %480 = vdwg.mxu0
        %v482 = vlaneseq
        %v483 = vshrl.u32 %v482, 7
        %v484 = vsub.s32 0, %v483
        %v485 = vrot.slane %v292, %v484
        %488 = vrot.lane.b32.xlu0 %v404, 96
        %v489 = vpop.permute.xlu0 %488
        %vm490 = vcmask 64512
        %v491 = vsel %vm490, %v404, 0
        %v493 = vsel %vm490, %v489, 0
        %495 = vmatprep.subr.mxu0 0.0
        %496 = vmatpush1.xpose.msra.mxu0 %v493
        %497 = vmatprep.subr.mxu0 0.0
        %498 = vmatpush1.xpose.msra.mxu0 0.0
        %499 = vmatprep.subr.mxu0 0.0
        %500 = vmatpush1.xpose.msra.mxu0 0.0
        %501 = vmatprep.subr.mxu0 0.0
        %502 = vmatpush1.xpose.msra.mxu0 0.0
        %503 = vmatprep.subr.mxu0 0.0
        %504 = vmatpush1.xpose.msra.mxu0 0.0
        %505 = vmatprep.subr.mxu0 0.0
        %506 = vmatpush1.xpose.msra.mxu0 0.0
        %507 = vmatprep.subr.mxu0 0.0
        %508 = vmatpush1.xpose.msra.mxu0 0.0
        %509 = vmatprep.subr.mxu0 0.0
        %510 = vmatpush1.xpose.msra.mxu0 0.0
        %511 = vmatprep.subr.mxu0 0.0
        %512 = vmatpush1.xpose.msra.mxu0 0.0
        %513 = vmatprep.subr.mxu0 0.0
        %514 = vmatpush1.xpose.msra.mxu0 0.0
        %515 = vmatprep.subr.mxu0 0.0
        %516 = vmatpush1.xpose.msra.mxu0 0.0
        %517 = vmatprep.subr.mxu0 0.0
        %518 = vmatpush1.xpose.msra.mxu0 0.0
        %519 = vmatprep.subr.mxu0 0.0
        %520 = vmatpush1.xpose.msra.mxu0 0.0
        %521 = vmatprep.subr.mxu0 0.0
        %522 = vmatpush1.xpose.msra.mxu0 0.0
        %523 = vmatprep.subr.mxu0 0.0
        %524 = vmatpush1.xpose.msra.mxu0 0.0
        %525 = vmatprep.subr.mxu0 0.0
        %526 = vmatpush1.xpose.msra.mxu0 0.0
        %527 = vmatprep.subr.mxu0 0.0
        %528 = vmatpush1.xpose.msra.mxu0 0.0
        %529 = vmatprep.subr.mxu0 0.0
        %530 = vmatpush1.xpose.msra.mxu0 0.0
        %531 = vmatprep.subr.mxu0 0.0
        %532 = vmatpush1.xpose.msra.mxu0 0.0
        %533 = vmatprep.subr.mxu0 0.0
        %534 = vmatpush1.xpose.msra.mxu0 0.0
        %535 = vmatprep.subr.mxu0 0.0
        %536 = vmatpush1.xpose.msra.mxu0 0.0
        %537 = vmatprep.subr.mxu0 0.0
        %538 = vmatpush1.xpose.msra.mxu0 0.0
        %539 = vmatprep.subr.mxu0 0.0
        %540 = vmatpush1.xpose.msra.mxu0 0.0
        %541 = vmatprep.subr.mxu0 0.0
        %542 = vmatpush1.xpose.msra.mxu0 0.0
        %543 = vmatprep.subr.mxu0 0.0
        %544 = vmatpush1.xpose.msra.mxu0 0.0
        %545 = vmatprep.subr.mxu0 0.0
        %546 = vmatpush1.xpose.msra.mxu0 0.0
        %547 = vmatprep.subr.mxu0 0.0
        %548 = vmatpush1.xpose.msra.mxu0 0.0
        %549 = vmatprep.subr.mxu0 0.0
        %550 = vmatpush1.xpose.msra.mxu0 0.0
        %551 = vmatprep.subr.mxu0 0.0
        %552 = vmatpush1.xpose.msra.mxu0 0.0
        %553 = vmatprep.subr.mxu0 0.0
        %554 = vmatpush1.xpose.msra.mxu0 0.0
        %555 = vmatprep.subr.mxu0 0.0
        %556 = vmatpush1.xpose.msra.mxu0 0.0
        %557 = vmatprep.subr.mxu0 0.0
        %558 = vmatpush1.xpose.msra.mxu0 0.0
        %559 = vmatprep.mubr.f32.mxu0 0.0
        %560 = vmatmul.mubr.f32.gmra.mrb[0].mxu0 %v491
        %v561 = vpop.f32.mrb[0].mxu0
        %v562 = vadd.f32 %v485, %v561
        %v563 = vpop.f32.mrb[0].mxu0
        %564 = vdwg.mxu0
        %v565 = vsel %vm490, %v562, -inf
        %566 = vmax.xlane.f32.xlu0 %v565
        %v567 = vpop.xlane.xlu0 %566
        %v568 = vsub.f32 %v562, %v567
        %v569 = vmul.f32 %v568, 1.442695
        %v570 = vpow.pop %v569
        %v572 = vsel %vm490, %v570, 0
        %574 = vmatprep.subr.mxu0 0.0
        %575 = vmatpush1.msra.mxu0 1.0
        %576 = vmatprep.subr.mxu0 0.0
        %577 = vmatpush1.msra.mxu0 0.0
        %578 = vmatprep.subr.mxu0 0.0
        %579 = vmatpush1.msra.mxu0 0.0
        %580 = vmatprep.subr.mxu0 0.0
        %581 = vmatpush1.msra.mxu0 0.0
        %582 = vmatprep.subr.mxu0 0.0
        %583 = vmatpush1.msra.mxu0 0.0
        %584 = vmatprep.subr.mxu0 0.0
        %585 = vmatpush1.msra.mxu0 0.0
        %586 = vmatprep.subr.mxu0 0.0
        %587 = vmatpush1.msra.mxu0 0.0
        %588 = vmatprep.subr.mxu0 0.0
        %589 = vmatpush1.msra.mxu0 0.0
        %590 = vmatprep.subr.mxu0 0.0
        %591 = vmatpush1.msra.mxu0 0.0
        %592 = vmatprep.subr.mxu0 0.0
        %593 = vmatpush1.msra.mxu0 0.0
        %594 = vmatprep.subr.mxu0 0.0
        %595 = vmatpush1.msra.mxu0 0.0
        %596 = vmatprep.subr.mxu0 0.0
        %597 = vmatpush1.msra.mxu0 0.0
        %598 = vmatprep.subr.mxu0 0.0
        %599 = vmatpush1.msra.mxu0 0.0
        %600 = vmatprep.subr.mxu0 0.0
        %601 = vmatpush1.msra.mxu0 0.0
        %602 = vmatprep.subr.mxu0 0.0
        %603 = vmatpush1.msra.mxu0 0.0
        %604 = vmatprep.subr.mxu0 0.0
        %605 = vmatpush1.msra.mxu0 0.0
        %606 = vmatprep.subr.mxu0 0.0
        %607 = vmatpush1.msra.mxu0 0.0
        %608 = vmatprep.subr.mxu0 0.0
        %609 = vmatpush1.msra.mxu0 0.0
        %610 = vmatprep.subr.mxu0 0.0
        %611 = vmatpush1.msra.mxu0 0.0
        %612 = vmatprep.subr.mxu0 0.0
        %613 = vmatpush1.msra.mxu0 0.0
        %614 = vmatprep.subr.mxu0 0.0
        %615 = vmatpush1.msra.mxu0 0.0
        %616 = vmatprep.subr.mxu0 0.0
        %617 = vmatpush1.msra.mxu0 0.0
        %618 = vmatprep.subr.mxu0 0.0
        %619 = vmatpush1.msra.mxu0 0.0
        %620 = vmatprep.subr.mxu0 0.0
        %621 = vmatpush1.msra.mxu0 0.0
        %622 = vmatprep.subr.mxu0 0.0
        %623 = vmatpush1.msra.mxu0 0.0
        %624 = vmatprep.subr.mxu0 0.0
        %625 = vmatpush1.msra.mxu0 0.0
        %626 = vmatprep.subr.mxu0 0.0
        %627 = vmatpush1.msra.mxu0 0.0
        %628 = vmatprep.subr.mxu0 0.0
        %629 = vmatpush1.msra.mxu0 0.0
        %630 = vmatprep.subr.mxu0 0.0
        %631 = vmatpush1.msra.mxu0 0.0
        %632 = vmatprep.subr.mxu0 0.0
        %633 = vmatpush1.msra.mxu0 0.0
        %634 = vmatprep.subr.mxu0 0.0
        %635 = vmatpush1.msra.mxu0 0.0
        %636 = vmatprep.subr.mxu0 0.0
        %637 = vmatpush1.msra.mxu0 0.0
        %638 = vmatprep.mubr.f32.mxu0 0.0
        %639 = vmatmul.mubr.f32.gmra.mrb[0].mxu0 %v572
        %v640 = vpop.f32.mrb[0].mxu0
        %v641 = vadd.f32 0.0, %v640
        %v642 = vpop.f32.mrb[0].mxu0
        %643 = vdwg.mxu0
        %644 = vmatprep.subr.mxu0 0.0
        %645 = vmatpush1.msra.mxu0 %v478
        %646 = vmatprep.subr.mxu0 0.0
        %647 = vmatpush1.msra.mxu0 0.0
        %648 = vmatprep.subr.mxu0 0.0
        %649 = vmatpush1.msra.mxu0 0.0
        %650 = vmatprep.subr.mxu0 0.0
        %651 = vmatpush1.msra.mxu0 0.0
        %652 = vmatprep.subr.mxu0 0.0
        %653 = vmatpush1.msra.mxu0 0.0
        %654 = vmatprep.subr.mxu0 0.0
        %655 = vmatpush1.msra.mxu0 0.0
        %656 = vmatprep.subr.mxu0 0.0
        %657 = vmatpush1.msra.mxu0 0.0
        %658 = vmatprep.subr.mxu0 0.0
        %659 = vmatpush1.msra.mxu0 0.0
        %660 = vmatprep.subr.mxu0 0.0
        %661 = vmatpush1.msra.mxu0 0.0
        %662 = vmatprep.subr.mxu0 0.0
        %663 = vmatpush1.msra.mxu0 0.0
        %664 = vmatprep.subr.mxu0 0.0
        %665 = vmatpush1.msra.mxu0 0.0
        %666 = vmatprep.subr.mxu0 0.0
        %667 = vmatpush1.msra.mxu0 0.0
        %668 = vmatprep.subr.mxu0 0.0
        %669 = vmatpush1.msra.mxu0 0.0
        %670 = vmatprep.subr.mxu0 0.0
        %671 = vmatpush1.msra.mxu0 0.0
        %672 = vmatprep.subr.mxu0 0.0
        %673 = vmatpush1.msra.mxu0 0.0
        %674 = vmatprep.subr.mxu0 0.0
        %675 = vmatpush1.msra.mxu0 0.0
        %676 = vmatprep.subr.mxu0 0.0
        %677 = vmatpush1.msra.mxu0 0.0
        %678 = vmatprep.subr.mxu0 0.0
        %679 = vmatpush1.msra.mxu0 0.0
        %680 = vmatprep.subr.mxu0 0.0
        %681 = vmatpush1.msra.mxu0 0.0
        %682 = vmatprep.subr.mxu0 0.0
        %683 = vmatpush1.msra.mxu0 0.0
        %684 = vmatprep.subr.mxu0 0.0
        %685 = vmatpush1.msra.mxu0 0.0
        %686 = vmatprep.subr.mxu0 0.0
        %687 = vmatpush1.msra.mxu0 0.0
        %688 = vmatprep.subr.mxu0 0.0
        %689 = vmatpush1.msra.mxu0 0.0
        %690 = vmatprep.subr.mxu0 0.0
        %691 = vmatpush1.msra.mxu0 0.0
        %692 = vmatprep.subr.mxu0 0.0
        %693 = vmatpush1.msra.mxu0 0.0
        %694 = vmatprep.subr.mxu0 0.0
        %695 = vmatpush1.msra.mxu0 0.0
        %696 = vmatprep.subr.mxu0 0.0
        %697 = vmatpush1.msra.mxu0 0.0
        %698 = vmatprep.subr.mxu0 0.0
        %699 = vmatpush1.msra.mxu0 0.0
        %700 = vmatprep.subr.mxu0 0.0
        %701 = vmatpush1.msra.mxu0 0.0
        %702 = vmatprep.subr.mxu0 0.0
        %703 = vmatpush1.msra.mxu0 0.0
        %704 = vmatprep.subr.mxu0 0.0
        %705 = vmatpush1.msra.mxu0 0.0
        %706 = vmatprep.subr.mxu0 0.0
        %707 = vmatpush1.msra.mxu0 0.0
        %708 = vmatprep.mubr.f32.mxu0 0.0
        %709 = vmatmul.mubr.f32.gmra.mrb[0].mxu0 %v572
        %v710 = vpop.f32.mrb[0].mxu0
        %v711 = vadd.f32 0.0, %v710
        %v712 = vpop.f32.mrb[0].mxu0
        %713 = vdwg.mxu0
        %v714 = vrcp.pop %v641
        %716 = vset.pattern.permute.xlu0 0
        %717 = vperm.xlu0 %716, %v714
        %v718 = vpop.permute.xlu0 %717
        %v720 = vmul.f32 %v711, %v718
        %v721 = vlaneseq
        %v722 = vshrl.u32 %v721, 7
        %v723 = vsub.s32 1, %v722
        %v724 = vrot.slane %v289, %v723
        %v725 = vadd.f32 %v724, %v720
        %726 = vrot.lane.b32.xlu0 %v404, 120
        %v727 = vpop.permute.xlu0 %726
        %728 = vrot.lane.b32.xlu0 %v404, 88
        %v729 = vpop.permute.xlu0 %728
        %v730 = vsel %vm490, %v727, 0
        %v732 = vsel %vm490, %v729, 0
        %734 = vmatprep.subr.mxu0 0.0
        %735 = vmatpush1.xpose.msra.mxu0 %v732
        %736 = vmatprep.subr.mxu0 0.0
        %737 = vmatpush1.xpose.msra.mxu0 0.0
        %738 = vmatprep.subr.mxu0 0.0
        %739 = vmatpush1.xpose.msra.mxu0 0.0
        %740 = vmatprep.subr.mxu0 0.0
        %741 = vmatpush1.xpose.msra.mxu0 0.0
        %742 = vmatprep.subr.mxu0 0.0
        %743 = vmatpush1.xpose.msra.mxu0 0.0
        %744 = vmatprep.subr.mxu0 0.0
        %745 = vmatpush1.xpose.msra.mxu0 0.0
        %746 = vmatprep.subr.mxu0 0.0
        %747 = vmatpush1.xpose.msra.mxu0 0.0
        %748 = vmatprep.subr.mxu0 0.0
        %749 = vmatpush1.xpose.msra.mxu0 0.0
        %750 = vmatprep.subr.mxu0 0.0
        %751 = vmatpush1.xpose.msra.mxu0 0.0
        %752 = vmatprep.subr.mxu0 0.0
        %753 = vmatpush1.xpose.msra.mxu0 0.0
        %754 = vmatprep.subr.mxu0 0.0
        %755 = vmatpush1.xpose.msra.mxu0 0.0
        %756 = vmatprep.subr.mxu0 0.0
        %757 = vmatpush1.xpose.msra.mxu0 0.0
        %758 = vmatprep.subr.mxu0 0.0
        %759 = vmatpush1.xpose.msra.mxu0 0.0
        %760 = vmatprep.subr.mxu0 0.0
        %761 = vmatpush1.xpose.msra.mxu0 0.0
        %762 = vmatprep.subr.mxu0 0.0
        %763 = vmatpush1.xpose.msra.mxu0 0.0
        %764 = vmatprep.subr.mxu0 0.0
        %765 = vmatpush1.xpose.msra.mxu0 0.0
        %766 = vmatprep.subr.mxu0 0.0
        %767 = vmatpush1.xpose.msra.mxu0 0.0
        %768 = vmatprep.subr.mxu0 0.0
        %769 = vmatpush1.xpose.msra.mxu0 0.0
        %770 = vmatprep.subr.mxu0 0.0
        %771 = vmatpush1.xpose.msra.mxu0 0.0
        %772 = vmatprep.subr.mxu0 0.0
        %773 = vmatpush1.xpose.msra.mxu0 0.0
        %774 = vmatprep.subr.mxu0 0.0
        %775 = vmatpush1.xpose.msra.mxu0 0.0
        %776 = vmatprep.subr.mxu0 0.0
        %777 = vmatpush1.xpose.msra.mxu0 0.0
        %778 = vmatprep.subr.mxu0 0.0
        %779 = vmatpush1.xpose.msra.mxu0 0.0
        %780 = vmatprep.subr.mxu0 0.0
        %781 = vmatpush1.xpose.msra.mxu0 0.0
        %782 = vmatprep.subr.mxu0 0.0
        %783 = vmatpush1.xpose.msra.mxu0 0.0
        %784 = vmatprep.subr.mxu0 0.0
        %785 = vmatpush1.xpose.msra.mxu0 0.0
        %786 = vmatprep.subr.mxu0 0.0
        %787 = vmatpush1.xpose.msra.mxu0 0.0
        %788 = vmatprep.subr.mxu0 0.0
        %789 = vmatpush1.xpose.msra.mxu0 0.0
        %790 = vmatprep.subr.mxu0 0.0
        %791 = vmatpush1.xpose.msra.mxu0 0.0
        %792 = vmatprep.subr.mxu0 0.0
        %793 = vmatpush1.xpose.msra.mxu0 0.0
        %794 = vmatprep.subr.mxu0 0.0
        %795 = vmatpush1.xpose.msra.mxu0 0.0
        %796 = vmatprep.subr.mxu0 0.0
        %797 = vmatpush1.xpose.msra.mxu0 0.0
        %798 = vmatprep.mubr.f32.mxu0 0.0
        %799 = vmatmul.mubr.f32.gmra.mrb[0].mxu0 %v730
        %v800 = vpop.f32.mrb[0].mxu0
        %v801 = vadd.f32 %v485, %v800
        %v802 = vpop.f32.mrb[0].mxu0
        %803 = vdwg.mxu0
        %v804 = vsel %vm490, %v801, -inf
        %805 = vmax.xlane.f32.xlu0 %v804
        %v806 = vpop.xlane.xlu0 %805
        %v807 = vsub.f32 %v801, %v806
        %v808 = vmul.f32 %v807, 1.442695
        %v809 = vpow.pop %v808
        %v811 = vsel %vm490, %v809, 0
        %813 = vmatprep.subr.mxu0 0.0
        %814 = vmatpush1.msra.mxu0 1.0
        %815 = vmatprep.subr.mxu0 0.0
        %816 = vmatpush1.msra.mxu0 0.0
        %817 = vmatprep.subr.mxu0 0.0
        %818 = vmatpush1.msra.mxu0 0.0
        %819 = vmatprep.subr.mxu0 0.0
        %820 = vmatpush1.msra.mxu0 0.0
        %821 = vmatprep.subr.mxu0 0.0
        %822 = vmatpush1.msra.mxu0 0.0
        %823 = vmatprep.subr.mxu0 0.0
        %824 = vmatpush1.msra.mxu0 0.0
        %825 = vmatprep.subr.mxu0 0.0
        %826 = vmatpush1.msra.mxu0 0.0
        %827 = vmatprep.subr.mxu0 0.0
        %828 = vmatpush1.msra.mxu0 0.0
        %829 = vmatprep.subr.mxu0 0.0
        %830 = vmatpush1.msra.mxu0 0.0
        %831 = vmatprep.subr.mxu0 0.0
        %832 = vmatpush1.msra.mxu0 0.0
        %833 = vmatprep.subr.mxu0 0.0
        %834 = vmatpush1.msra.mxu0 0.0
        %835 = vmatprep.subr.mxu0 0.0
        %836 = vmatpush1.msra.mxu0 0.0
        %837 = vmatprep.subr.mxu0 0.0
        %838 = vmatpush1.msra.mxu0 0.0
        %839 = vmatprep.subr.mxu0 0.0
        %840 = vmatpush1.msra.mxu0 0.0
        %841 = vmatprep.subr.mxu0 0.0
        %842 = vmatpush1.msra.mxu0 0.0
        %843 = vmatprep.subr.mxu0 0.0
        %844 = vmatpush1.msra.mxu0 0.0
        %845 = vmatprep.subr.mxu0 0.0
        %846 = vmatpush1.msra.mxu0 0.0
        %847 = vmatprep.subr.mxu0 0.0
        %848 = vmatpush1.msra.mxu0 0.0
        %849 = vmatprep.subr.mxu0 0.0
        %850 = vmatpush1.msra.mxu0 0.0
        %851 = vmatprep.subr.mxu0 0.0
        %852 = vmatpush1.msra.mxu0 0.0
        %853 = vmatprep.subr.mxu0 0.0
        %854 = vmatpush1.msra.mxu0 0.0
        %855 = vmatprep.subr.mxu0 0.0
        %856 = vmatpush1.msra.mxu0 0.0
        %857 = vmatprep.subr.mxu0 0.0
        %858 = vmatpush1.msra.mxu0 0.0
        %859 = vmatprep.subr.mxu0 0.0
        %860 = vmatpush1.msra.mxu0 0.0
        %861 = vmatprep.subr.mxu0 0.0
        %862 = vmatpush1.msra.mxu0 0.0
        %863 = vmatprep.subr.mxu0 0.0
        %864 = vmatpush1.msra.mxu0 0.0
        %865 = vmatprep.subr.mxu0 0.0
        %866 = vmatpush1.msra.mxu0 0.0
        %867 = vmatprep.subr.mxu0 0.0
        %868 = vmatpush1.msra.mxu0 0.0
        %869 = vmatprep.subr.mxu0 0.0
        %870 = vmatpush1.msra.mxu0 0.0
        %871 = vmatprep.subr.mxu0 0.0
        %872 = vmatpush1.msra.mxu0 0.0
        %873 = vmatprep.subr.mxu0 0.0
        %874 = vmatpush1.msra.mxu0 0.0
        %875 = vmatprep.subr.mxu0 0.0
        %876 = vmatpush1.msra.mxu0 0.0
        %877 = vmatprep.mubr.f32.mxu0 0.0
        %878 = vmatmul.mubr.f32.gmra.mrb[0].mxu0 %v811
        %v879 = vpop.f32.mrb[0].mxu0
        %v880 = vadd.f32 0.0, %v879
        %v881 = vpop.f32.mrb[0].mxu0
        %882 = vdwg.mxu0
        %884 = vrot.lane.b32.xlu0 %v478, 96
        %v885 = vpop.permute.xlu0 %884
        %887 = vmatprep.subr.mxu0 0.0
        %888 = vmatpush1.msra.mxu0 %v885
        %889 = vmatprep.subr.mxu0 0.0
        %890 = vmatpush1.msra.mxu0 0.0
        %891 = vmatprep.subr.mxu0 0.0
        %892 = vmatpush1.msra.mxu0 0.0
        %893 = vmatprep.subr.mxu0 0.0
        %894 = vmatpush1.msra.mxu0 0.0
        %895 = vmatprep.subr.mxu0 0.0
        %896 = vmatpush1.msra.mxu0 0.0
        %897 = vmatprep.subr.mxu0 0.0
        %898 = vmatpush1.msra.mxu0 0.0
        %899 = vmatprep.subr.mxu0 0.0
        %900 = vmatpush1.msra.mxu0 0.0
        %901 = vmatprep.subr.mxu0 0.0
        %902 = vmatpush1.msra.mxu0 0.0
        %903 = vmatprep.subr.mxu0 0.0
        %904 = vmatpush1.msra.mxu0 0.0
        %905 = vmatprep.subr.mxu0 0.0
        %906 = vmatpush1.msra.mxu0 0.0
        %907 = vmatprep.subr.mxu0 0.0
        %908 = vmatpush1.msra.mxu0 0.0
        %909 = vmatprep.subr.mxu0 0.0
        %910 = vmatpush1.msra.mxu0 0.0
        %911 = vmatprep.subr.mxu0 0.0
        %912 = vmatpush1.msra.mxu0 0.0
        %913 = vmatprep.subr.mxu0 0.0
        %914 = vmatpush1.msra.mxu0 0.0
        %915 = vmatprep.subr.mxu0 0.0
        %916 = vmatpush1.msra.mxu0 0.0
        %917 = vmatprep.subr.mxu0 0.0
        %918 = vmatpush1.msra.mxu0 0.0
        %919 = vmatprep.subr.mxu0 0.0
        %920 = vmatpush1.msra.mxu0 0.0
        %921 = vmatprep.subr.mxu0 0.0
        %922 = vmatpush1.msra.mxu0 0.0
        %923 = vmatprep.subr.mxu0 0.0
        %924 = vmatpush1.msra.mxu0 0.0
        %925 = vmatprep.subr.mxu0 0.0
        %926 = vmatpush1.msra.mxu0 0.0
        %927 = vmatprep.subr.mxu0 0.0
        %928 = vmatpush1.msra.mxu0 0.0
        %929 = vmatprep.subr.mxu0 0.0
        %930 = vmatpush1.msra.mxu0 0.0
        %931 = vmatprep.subr.mxu0 0.0
        %932 = vmatpush1.msra.mxu0 0.0
        %933 = vmatprep.subr.mxu0 0.0
        %934 = vmatpush1.msra.mxu0 0.0
        %935 = vmatprep.subr.mxu0 0.0
        %936 = vmatpush1.msra.mxu0 0.0
        %937 = vmatprep.subr.mxu0 0.0
        %938 = vmatpush1.msra.mxu0 0.0
        %939 = vmatprep.subr.mxu0 0.0
        %940 = vmatpush1.msra.mxu0 0.0
        %941 = vmatprep.subr.mxu0 0.0
        %942 = vmatpush1.msra.mxu0 0.0
        %943 = vmatprep.subr.mxu0 0.0
        %944 = vmatpush1.msra.mxu0 0.0
        %945 = vmatprep.subr.mxu0 0.0
        %946 = vmatpush1.msra.mxu0 0.0
        %947 = vmatprep.subr.mxu0 0.0
        %948 = vmatpush1.msra.mxu0 0.0
        %949 = vmatprep.subr.mxu0 0.0
        %950 = vmatpush1.msra.mxu0 0.0
        %951 = vmatprep.mubr.f32.mxu0 0.0
        %952 = vmatmul.mubr.f32.gmra.mrb[0].mxu0 %v811
        %v953 = vpop.f32.mrb[0].mxu0
        %v954 = vadd.f32 0.0, %v953
        %v955 = vpop.f32.mrb[0].mxu0
        %956 = vdwg.mxu0
        %v957 = vrcp.pop %v880
        %959 = vset.pattern.permute.xlu0 0
        %960 = vperm.xlu0 %959, %v957
        %v961 = vpop.permute.xlu0 %960
        %v963 = vmul.f32 %v954, %v961
        %v964 = vadd.f32 %v725, %v963
        %965 = vrot.lane.b32.xlu0 %v404, 112
        %v966 = vpop.permute.xlu0 %965
        %967 = vrot.lane.b32.xlu0 %v404, 80
        %v968 = vpop.permute.xlu0 %967
        %v969 = vsel %vm490, %v966, 0
        %v971 = vsel %vm490, %v968, 0
        %973 = vmatprep.subr.mxu0 0.0
        %974 = vmatpush1.xpose.msra.mxu0 %v971
        %975 = vmatprep.subr.mxu0 0.0
        %976 = vmatpush1.xpose.msra.mxu0 0.0
        %977 = vmatprep.subr.mxu0 0.0
        %978 = vmatpush1.xpose.msra.mxu0 0.0
        %979 = vmatprep.subr.mxu0 0.0
        %980 = vmatpush1.xpose.msra.mxu0 0.0
        %981 = vmatprep.subr.mxu0 0.0
        %982 = vmatpush1.xpose.msra.mxu0 0.0
        %983 = vmatprep.subr.mxu0 0.0
        %984 = vmatpush1.xpose.msra.mxu0 0.0
        %985 = vmatprep.subr.mxu0 0.0
        %986 = vmatpush1.xpose.msra.mxu0 0.0
        %987 = vmatprep.subr.mxu0 0.0
        %988 = vmatpush1.xpose.msra.mxu0 0.0
        %989 = vmatprep.subr.mxu0 0.0
        %990 = vmatpush1.xpose.msra.mxu0 0.0
        %991 = vmatprep.subr.mxu0 0.0
        %992 = vmatpush1.xpose.msra.mxu0 0.0
        %993 = vmatprep.subr.mxu0 0.0
        %994 = vmatpush1.xpose.msra.mxu0 0.0
        %995 = vmatprep.subr.mxu0 0.0
        %996 = vmatpush1.xpose.msra.mxu0 0.0
        %997 = vmatprep.subr.mxu0 0.0
        %998 = vmatpush1.xpose.msra.mxu0 0.0
        %999 = vmatprep.subr.mxu0 0.0
        %1000 = vmatpush1.xpose.msra.mxu0 0.0
        %1001 = vmatprep.subr.mxu0 0.0
        %1002 = vmatpush1.xpose.msra.mxu0 0.0
        %1003 = vmatprep.subr.mxu0 0.0
        %1004 = vmatpush1.xpose.msra.mxu0 0.0
        %1005 = vmatprep.subr.mxu0 0.0
        %1006 = vmatpush1.xpose.msra.mxu0 0.0
        %1007 = vmatprep.subr.mxu0 0.0
        %1008 = vmatpush1.xpose.msra.mxu0 0.0
        %1009 = vmatprep.subr.mxu0 0.0
        %1010 = vmatpush1.xpose.msra.mxu0 0.0
        %1011 = vmatprep.subr.mxu0 0.0
        %1012 = vmatpush1.xpose.msra.mxu0 0.0
        %1013 = vmatprep.subr.mxu0 0.0
        %1014 = vmatpush1.xpose.msra.mxu0 0.0
        %1015 = vmatprep.subr.mxu0 0.0
        %1016 = vmatpush1.xpose.msra.mxu0 0.0
        %1017 = vmatprep.subr.mxu0 0.0
        %1018 = vmatpush1.xpose.msra.mxu0 0.0
        %1019 = vmatprep.subr.mxu0 0.0
        %1020 = vmatpush1.xpose.msra.mxu0 0.0
        %1021 = vmatprep.subr.mxu0 0.0
        %1022 = vmatpush1.xpose.msra.mxu0 0.0
        %1023 = vmatprep.subr.mxu0 0.0
        %1024 = vmatpush1.xpose.msra.mxu0 0.0
        %1025 = vmatprep.subr.mxu0 0.0
        %1026 = vmatpush1.xpose.msra.mxu0 0.0
        %1027 = vmatprep.subr.mxu0 0.0
        %1028 = vmatpush1.xpose.msra.mxu0 0.0
        %1029 = vmatprep.subr.mxu0 0.0
        %1030 = vmatpush1.xpose.msra.mxu0 0.0
        %1031 = vmatprep.subr.mxu0 0.0
        %1032 = vmatpush1.xpose.msra.mxu0 0.0
        %1033 = vmatprep.subr.mxu0 0.0
        %1034 = vmatpush1.xpose.msra.mxu0 0.0
        %1035 = vmatprep.subr.mxu0 0.0
        %1036 = vmatpush1.xpose.msra.mxu0 0.0
        %1037 = vmatprep.mubr.f32.mxu0 0.0
        %1038 = vmatmul.mubr.f32.gmra.mrb[0].mxu0 %v969
        %v1039 = vpop.f32.mrb[0].mxu0
        %v1040 = vadd.f32 %v485, %v1039
        %v1041 = vpop.f32.mrb[0].mxu0
        %1042 = vdwg.mxu0
        %v1043 = vsel %vm490, %v1040, -inf
        %1044 = vmax.xlane.f32.xlu0 %v1043
        %v1045 = vpop.xlane.xlu0 %1044
        %v1046 = vsub.f32 %v1040, %v1045
        %v1047 = vmul.f32 %v1046, 1.442695
        %v1048 = vpow.pop %v1047
        %v1050 = vsel %vm490, %v1048, 0
        %1052 = vmatprep.subr.mxu0 0.0
        %1053 = vmatpush1.msra.mxu0 1.0
        %1054 = vmatprep.subr.mxu0 0.0
        %1055 = vmatpush1.msra.mxu0 0.0
        %1056 = vmatprep.subr.mxu0 0.0
        %1057 = vmatpush1.msra.mxu0 0.0
        %1058 = vmatprep.subr.mxu0 0.0
        %1059 = vmatpush1.msra.mxu0 0.0
        %1060 = vmatprep.subr.mxu0 0.0
        %1061 = vmatpush1.msra.mxu0 0.0
        %1062 = vmatprep.subr.mxu0 0.0
        %1063 = vmatpush1.msra.mxu0 0.0
        %1064 = vmatprep.subr.mxu0 0.0
        %1065 = vmatpush1.msra.mxu0 0.0
        %1066 = vmatprep.subr.mxu0 0.0
        %1067 = vmatpush1.msra.mxu0 0.0
        %1068 = vmatprep.subr.mxu0 0.0
        %1069 = vmatpush1.msra.mxu0 0.0
        %1070 = vmatprep.subr.mxu0 0.0
        %1071 = vmatpush1.msra.mxu0 0.0
        %1072 = vmatprep.subr.mxu0 0.0
        %1073 = vmatpush1.msra.mxu0 0.0
        %1074 = vmatprep.subr.mxu0 0.0
        %1075 = vmatpush1.msra.mxu0 0.0
        %1076 = vmatprep.subr.mxu0 0.0
        %1077 = vmatpush1.msra.mxu0 0.0
        %1078 = vmatprep.subr.mxu0 0.0
        %1079 = vmatpush1.msra.mxu0 0.0
        %1080 = vmatprep.subr.mxu0 0.0
        %1081 = vmatpush1.msra.mxu0 0.0
        %1082 = vmatprep.subr.mxu0 0.0
        %1083 = vmatpush1.msra.mxu0 0.0
        %1084 = vmatprep.subr.mxu0 0.0
        %1085 = vmatpush1.msra.mxu0 0.0
        %1086 = vmatprep.subr.mxu0 0.0
        %1087 = vmatpush1.msra.mxu0 0.0
        %1088 = vmatprep.subr.mxu0 0.0
        %1089 = vmatpush1.msra.mxu0 0.0
        %1090 = vmatprep.subr.mxu0 0.0
        %1091 = vmatpush1.msra.mxu0 0.0
        %1092 = vmatprep.subr.mxu0 0.0
        %1093 = vmatpush1.msra.mxu0 0.0
        %1094 = vmatprep.subr.mxu0 0.0
        %1095 = vmatpush1.msra.mxu0 0.0
        %1096 = vmatprep.subr.mxu0 0.0
        %1097 = vmatpush1.msra.mxu0 0.0
        %1098 = vmatprep.subr.mxu0 0.0
        %1099 = vmatpush1.msra.mxu0 0.0
        %1100 = vmatprep.subr.mxu0 0.0
        %1101 = vmatpush1.msra.mxu0 0.0
        %1102 = vmatprep.subr.mxu0 0.0
        %1103 = vmatpush1.msra.mxu0 0.0
        %1104 = vmatprep.subr.mxu0 0.0
        %1105 = vmatpush1.msra.mxu0 0.0
        %1106 = vmatprep.subr.mxu0 0.0
        %1107 = vmatpush1.msra.mxu0 0.0
        %1108 = vmatprep.subr.mxu0 0.0
        %1109 = vmatpush1.msra.mxu0 0.0
        %1110 = vmatprep.subr.mxu0 0.0
        %1111 = vmatpush1.msra.mxu0 0.0
        %1112 = vmatprep.subr.mxu0 0.0
        %1113 = vmatpush1.msra.mxu0 0.0
        %1114 = vmatprep.subr.mxu0 0.0
        %1115 = vmatpush1.msra.mxu0 0.0
        %1116 = vmatprep.mubr.f32.mxu0 0.0
        %1117 = vmatmul.mubr.f32.gmra.mrb[0].mxu0 %v1050
        %v1118 = vpop.f32.mrb[0].mxu0
        %v1119 = vadd.f32 0.0, %v1118
        %v1120 = vpop.f32.mrb[0].mxu0
        %1121 = vdwg.mxu0
        %1122 = vrot.lane.b32.xlu0 %v478, 64
        %v1123 = vpop.permute.xlu0 %1122
        %1125 = vmatprep.subr.mxu0 0.0
        %1126 = vmatpush1.msra.mxu0 %v1123
        %1127 = vmatprep.subr.mxu0 0.0
        %1128 = vmatpush1.msra.mxu0 0.0
        %1129 = vmatprep.subr.mxu0 0.0
        %1130 = vmatpush1.msra.mxu0 0.0
        %1131 = vmatprep.subr.mxu0 0.0
        %1132 = vmatpush1.msra.mxu0 0.0
        %1133 = vmatprep.subr.mxu0 0.0
        %1134 = vmatpush1.msra.mxu0 0.0
        %1135 = vmatprep.subr.mxu0 0.0
        %1136 = vmatpush1.msra.mxu0 0.0
        %1137 = vmatprep.subr.mxu0 0.0
        %1138 = vmatpush1.msra.mxu0 0.0
        %1139 = vmatprep.subr.mxu0 0.0
        %1140 = vmatpush1.msra.mxu0 0.0
        %1141 = vmatprep.subr.mxu0 0.0
        %1142 = vmatpush1.msra.mxu0 0.0
        %1143 = vmatprep.subr.mxu0 0.0
        %1144 = vmatpush1.msra.mxu0 0.0
        %1145 = vmatprep.subr.mxu0 0.0
        %1146 = vmatpush1.msra.mxu0 0.0
        %1147 = vmatprep.subr.mxu0 0.0
        %1148 = vmatpush1.msra.mxu0 0.0
        %1149 = vmatprep.subr.mxu0 0.0
        %1150 = vmatpush1.msra.mxu0 0.0
        %1151 = vmatprep.subr.mxu0 0.0
        %1152 = vmatpush1.msra.mxu0 0.0
        %1153 = vmatprep.subr.mxu0 0.0
        %1154 = vmatpush1.msra.mxu0 0.0
        %1155 = vmatprep.subr.mxu0 0.0
        %1156 = vmatpush1.msra.mxu0 0.0
        %1157 = vmatprep.subr.mxu0 0.0
        %1158 = vmatpush1.msra.mxu0 0.0
        %1159 = vmatprep.subr.mxu0 0.0
        %1160 = vmatpush1.msra.mxu0 0.0
        %1161 = vmatprep.subr.mxu0 0.0
        %1162 = vmatpush1.msra.mxu0 0.0
        %1163 = vmatprep.subr.mxu0 0.0
        %1164 = vmatpush1.msra.mxu0 0.0
        %1165 = vmatprep.subr.mxu0 0.0
        %1166 = vmatpush1.msra.mxu0 0.0
        %1167 = vmatprep.subr.mxu0 0.0
        %1168 = vmatpush1.msra.mxu0 0.0
        %1169 = vmatprep.subr.mxu0 0.0
        %1170 = vmatpush1.msra.mxu0 0.0
        %1171 = vmatprep.subr.mxu0 0.0
        %1172 = vmatpush1.msra.mxu0 0.0
        %1173 = vmatprep.subr.mxu0 0.0
        %1174 = vmatpush1.msra.mxu0 0.0
        %1175 = vmatprep.subr.mxu0 0.0
        %1176 = vmatpush1.msra.mxu0 0.0
        %1177 = vmatprep.subr.mxu0 0.0
        %1178 = vmatpush1.msra.mxu0 0.0
        %1179 = vmatprep.subr.mxu0 0.0
        %1180 = vmatpush1.msra.mxu0 0.0
        %1181 = vmatprep.subr.mxu0 0.0
        %1182 = vmatpush1.msra.mxu0 0.0
        %1183 = vmatprep.subr.mxu0 0.0
        %1184 = vmatpush1.msra.mxu0 0.0
        %1185 = vmatprep.subr.mxu0 0.0
        %1186 = vmatpush1.msra.mxu0 0.0
        %1187 = vmatprep.subr.mxu0 0.0
        %1188 = vmatpush1.msra.mxu0 0.0
        %1189 = vmatprep.mubr.f32.mxu0 0.0
        %1190 = vmatmul.mubr.f32.gmra.mrb[0].mxu0 %v1050
        %v1191 = vpop.f32.mrb[0].mxu0
        %v1192 = vadd.f32 0.0, %v1191
        %v1193 = vpop.f32.mrb[0].mxu0
        %1194 = vdwg.mxu0
        %v1195 = vrcp.pop %v1119
        %1197 = vset.pattern.permute.xlu0 0
        %1198 = vperm.xlu0 %1197, %v1195
        %v1199 = vpop.permute.xlu0 %1198
        %v1201 = vmul.f32 %v1192, %v1199
        %v1202 = vadd.f32 %v964, %v1201
        %1203 = vrot.lane.b32.xlu0 %v404, 104
        %v1204 = vpop.permute.xlu0 %1203
        %1205 = vrot.lane.b32.xlu0 %v404, 72
        %v1206 = vpop.permute.xlu0 %1205
        %v1207 = vsel %vm490, %v1204, 0
        %v1209 = vsel %vm490, %v1206, 0
        %1211 = vmatprep.subr.mxu0 0.0
        %1212 = vmatpush1.xpose.msra.mxu0 %v1209
        %1213 = vmatprep.subr.mxu0 0.0
        %1214 = vmatpush1.xpose.msra.mxu0 0.0
        %1215 = vmatprep.subr.mxu0 0.0
        %1216 = vmatpush1.xpose.msra.mxu0 0.0
        %1217 = vmatprep.subr.mxu0 0.0
        %1218 = vmatpush1.xpose.msra.mxu0 0.0
        %1219 = vmatprep.subr.mxu0 0.0
        %1220 = vmatpush1.xpose.msra.mxu0 0.0
        %1221 = vmatprep.subr.mxu0 0.0
        %1222 = vmatpush1.xpose.msra.mxu0 0.0
        %1223 = vmatprep.subr.mxu0 0.0
        %1224 = vmatpush1.xpose.msra.mxu0 0.0
        %1225 = vmatprep.subr.mxu0 0.0
        %1226 = vmatpush1.xpose.msra.mxu0 0.0
        %1227 = vmatprep.subr.mxu0 0.0
        %1228 = vmatpush1.xpose.msra.mxu0 0.0
        %1229 = vmatprep.subr.mxu0 0.0
        %1230 = vmatpush1.xpose.msra.mxu0 0.0
        %1231 = vmatprep.subr.mxu0 0.0
        %1232 = vmatpush1.xpose.msra.mxu0 0.0
        %1233 = vmatprep.subr.mxu0 0.0
        %1234 = vmatpush1.xpose.msra.mxu0 0.0
        %1235 = vmatprep.subr.mxu0 0.0
        %1236 = vmatpush1.xpose.msra.mxu0 0.0
        %1237 = vmatprep.subr.mxu0 0.0
        %1238 = vmatpush1.xpose.msra.mxu0 0.0
        %1239 = vmatprep.subr.mxu0 0.0
        %1240 = vmatpush1.xpose.msra.mxu0 0.0
        %1241 = vmatprep.subr.mxu0 0.0
        %1242 = vmatpush1.xpose.msra.mxu0 0.0
        %1243 = vmatprep.subr.mxu0 0.0
        %1244 = vmatpush1.xpose.msra.mxu0 0.0
        %1245 = vmatprep.subr.mxu0 0.0
        %1246 = vmatpush1.xpose.msra.mxu0 0.0
        %1247 = vmatprep.subr.mxu0 0.0
        %1248 = vmatpush1.xpose.msra.mxu0 0.0
        %1249 = vmatprep.subr.mxu0 0.0
        %1250 = vmatpush1.xpose.msra.mxu0 0.0
        %1251 = vmatprep.subr.mxu0 0.0
        %1252 = vmatpush1.xpose.msra.mxu0 0.0
        %1253 = vmatprep.subr.mxu0 0.0
        %1254 = vmatpush1.xpose.msra.mxu0 0.0
        %1255 = vmatprep.subr.mxu0 0.0
        %1256 = vmatpush1.xpose.msra.mxu0 0.0
        %1257 = vmatprep.subr.mxu0 0.0
        %1258 = vmatpush1.xpose.msra.mxu0 0.0
        %1259 = vmatprep.subr.mxu0 0.0
        %1260 = vmatpush1.xpose.msra.mxu0 0.0
        %1261 = vmatprep.subr.mxu0 0.0
        %1262 = vmatpush1.xpose.msra.mxu0 0.0
        %1263 = vmatprep.subr.mxu0 0.0
        %1264 = vmatpush1.xpose.msra.mxu0 0.0
        %1265 = vmatprep.subr.mxu0 0.0
        %1266 = vmatpush1.xpose.msra.mxu0 0.0
        %1267 = vmatprep.subr.mxu0 0.0
        %1268 = vmatpush1.xpose.msra.mxu0 0.0
        %1269 = vmatprep.subr.mxu0 0.0
        %1270 = vmatpush1.xpose.msra.mxu0 0.0
        %1271 = vmatprep.subr.mxu0 0.0
        %1272 = vmatpush1.xpose.msra.mxu0 0.0
        %1273 = vmatprep.subr.mxu0 0.0
        %1274 = vmatpush1.xpose.msra.mxu0 0.0
        %1275 = vmatprep.mubr.f32.mxu0 0.0
        %1276 = vmatmul.mubr.f32.gmra.mrb[0].mxu0 %v1207
        %v1277 = vpop.f32.mrb[0].mxu0
        %v1278 = vadd.f32 %v485, %v1277
        %v1279 = vpop.f32.mrb[0].mxu0
        %1280 = vdwg.mxu0
        %v1281 = vsel %vm490, %v1278, -inf
        %1282 = vmax.xlane.f32.xlu0 %v1281
        %v1283 = vpop.xlane.xlu0 %1282
        %v1284 = vsub.f32 %v1278, %v1283
        %v1285 = vmul.f32 %v1284, 1.442695
        %v1286 = vpow.pop %v1285
        %v1288 = vsel %vm490, %v1286, 0
        %1290 = vmatprep.subr.mxu0 0.0
        %1291 = vmatpush1.msra.mxu0 1.0
        %1292 = vmatprep.subr.mxu0 0.0
        %1293 = vmatpush1.msra.mxu0 0.0
        %1294 = vmatprep.subr.mxu0 0.0
        %1295 = vmatpush1.msra.mxu0 0.0
        %1296 = vmatprep.subr.mxu0 0.0
        %1297 = vmatpush1.msra.mxu0 0.0
        %1298 = vmatprep.subr.mxu0 0.0
        %1299 = vmatpush1.msra.mxu0 0.0
        %1300 = vmatprep.subr.mxu0 0.0
        %1301 = vmatpush1.msra.mxu0 0.0
        %1302 = vmatprep.subr.mxu0 0.0
        %1303 = vmatpush1.msra.mxu0 0.0
        %1304 = vmatprep.subr.mxu0 0.0
        %1305 = vmatpush1.msra.mxu0 0.0
        %1306 = vmatprep.subr.mxu0 0.0
        %1307 = vmatpush1.msra.mxu0 0.0
        %1308 = vmatprep.subr.mxu0 0.0
        %1309 = vmatpush1.msra.mxu0 0.0
        %1310 = vmatprep.subr.mxu0 0.0
        %1311 = vmatpush1.msra.mxu0 0.0
        %1312 = vmatprep.subr.mxu0 0.0
        %1313 = vmatpush1.msra.mxu0 0.0
        %1314 = vmatprep.subr.mxu0 0.0
        %1315 = vmatpush1.msra.mxu0 0.0
        %1316 = vmatprep.subr.mxu0 0.0
        %1317 = vmatpush1.msra.mxu0 0.0
        %1318 = vmatprep.subr.mxu0 0.0
        %1319 = vmatpush1.msra.mxu0 0.0
        %1320 = vmatprep.subr.mxu0 0.0
        %1321 = vmatpush1.msra.mxu0 0.0
        %1322 = vmatprep.subr.mxu0 0.0
        %1323 = vmatpush1.msra.mxu0 0.0
        %1324 = vmatprep.subr.mxu0 0.0
        %1325 = vmatpush1.msra.mxu0 0.0
        %1326 = vmatprep.subr.mxu0 0.0
        %1327 = vmatpush1.msra.mxu0 0.0
        %1328 = vmatprep.subr.mxu0 0.0
        %1329 = vmatpush1.msra.mxu0 0.0
        %1330 = vmatprep.subr.mxu0 0.0
        %1331 = vmatpush1.msra.mxu0 0.0
        %1332 = vmatprep.subr.mxu0 0.0
        %1333 = vmatpush1.msra.mxu0 0.0
        %1334 = vmatprep.subr.mxu0 0.0
        %1335 = vmatpush1.msra.mxu0 0.0
        %1336 = vmatprep.subr.mxu0 0.0
        %1337 = vmatpush1.msra.mxu0 0.0
        %1338 = vmatprep.subr.mxu0 0.0
        %1339 = vmatpush1.msra.mxu0 0.0
        %1340 = vmatprep.subr.mxu0 0.0
        %1341 = vmatpush1.msra.mxu0 0.0
        %1342 = vmatprep.subr.mxu0 0.0
        %1343 = vmatpush1.msra.mxu0 0.0
        %1344 = vmatprep.subr.mxu0 0.0
        %1345 = vmatpush1.msra.mxu0 0.0
        %1346 = vmatprep.subr.mxu0 0.0
        %1347 = vmatpush1.msra.mxu0 0.0
        %1348 = vmatprep.subr.mxu0 0.0
        %1349 = vmatpush1.msra.mxu0 0.0
        %1350 = vmatprep.subr.mxu0 0.0
        %1351 = vmatpush1.msra.mxu0 0.0
        %1352 = vmatprep.subr.mxu0 0.0
        %1353 = vmatpush1.msra.mxu0 0.0
        %1354 = vmatprep.mubr.f32.mxu0 0.0
        %1355 = vmatmul.mubr.f32.gmra.mrb[0].mxu0 %v1288
        %v1356 = vpop.f32.mrb[0].mxu0
        %v1357 = vadd.f32 0.0, %v1356
        %v1358 = vpop.f32.mrb[0].mxu0
        %1359 = vdwg.mxu0
        %1360 = vrot.lane.b32.xlu0 %v478, 32
        %v1361 = vpop.permute.xlu0 %1360
        %1363 = vmatprep.subr.mxu0 0.0
        %1364 = vmatpush1.msra.mxu0 %v1361
        %1365 = vmatprep.subr.mxu0 0.0
        %1366 = vmatpush1.msra.mxu0 0.0
        %1367 = vmatprep.subr.mxu0 0.0
        %1368 = vmatpush1.msra.mxu0 0.0
        %1369 = vmatprep.subr.mxu0 0.0
        %1370 = vmatpush1.msra.mxu0 0.0
        %1371 = vmatprep.subr.mxu0 0.0
        %1372 = vmatpush1.msra.mxu0 0.0
        %1373 = vmatprep.subr.mxu0 0.0
        %1374 = vmatpush1.msra.mxu0 0.0
        %1375 = vmatprep.subr.mxu0 0.0
        %1376 = vmatpush1.msra.mxu0 0.0
        %1377 = vmatprep.subr.mxu0 0.0
        %1378 = vmatpush1.msra.mxu0 0.0
        %1379 = vmatprep.subr.mxu0 0.0
        %1380 = vmatpush1.msra.mxu0 0.0
        %1381 = vmatprep.subr.mxu0 0.0
        %1382 = vmatpush1.msra.mxu0 0.0
        %1383 = vmatprep.subr.mxu0 0.0
        %1384 = vmatpush1.msra.mxu0 0.0
        %1385 = vmatprep.subr.mxu0 0.0
        %1386 = vmatpush1.msra.mxu0 0.0
        %1387 = vmatprep.subr.mxu0 0.0
        %1388 = vmatpush1.msra.mxu0 0.0
        %1389 = vmatprep.subr.mxu0 0.0
        %1390 = vmatpush1.msra.mxu0 0.0
        %1391 = vmatprep.subr.mxu0 0.0
        %1392 = vmatpush1.msra.mxu0 0.0
        %1393 = vmatprep.subr.mxu0 0.0
        %1394 = vmatpush1.msra.mxu0 0.0
        %1395 = vmatprep.subr.mxu0 0.0
        %1396 = vmatpush1.msra.mxu0 0.0
        %1397 = vmatprep.subr.mxu0 0.0
        %1398 = vmatpush1.msra.mxu0 0.0
        %1399 = vmatprep.subr.mxu0 0.0
        %1400 = vmatpush1.msra.mxu0 0.0
        %1401 = vmatprep.subr.mxu0 0.0
        %1402 = vmatpush1.msra.mxu0 0.0
        %1403 = vmatprep.subr.mxu0 0.0
        %1404 = vmatpush1.msra.mxu0 0.0
        %1405 = vmatprep.subr.mxu0 0.0
        %1406 = vmatpush1.msra.mxu0 0.0
        %1407 = vmatprep.subr.mxu0 0.0
        %1408 = vmatpush1.msra.mxu0 0.0
        %1409 = vmatprep.subr.mxu0 0.0
        %1410 = vmatpush1.msra.mxu0 0.0
        %1411 = vmatprep.subr.mxu0 0.0
        %1412 = vmatpush1.msra.mxu0 0.0
        %1413 = vmatprep.subr.mxu0 0.0
        %1414 = vmatpush1.msra.mxu0 0.0
        %1415 = vmatprep.subr.mxu0 0.0
        %1416 = vmatpush1.msra.mxu0 0.0
        %1417 = vmatprep.subr.mxu0 0.0
        %1418 = vmatpush1.msra.mxu0 0.0
        %1419 = vmatprep.subr.mxu0 0.0
        %1420 = vmatpush1.msra.mxu0 0.0
        %1421 = vmatprep.subr.mxu0 0.0
        %1422 = vmatpush1.msra.mxu0 0.0
        %1423 = vmatprep.subr.mxu0 0.0
        %1424 = vmatpush1.msra.mxu0 0.0
        %1425 = vmatprep.subr.mxu0 0.0
        %1426 = vmatpush1.msra.mxu0 0.0
        %1427 = vmatprep.mubr.f32.mxu0 0.0
        %1428 = vmatmul.mubr.f32.gmra.mrb[0].mxu0 %v1288
        %v1429 = vpop.f32.mrb[0].mxu0
        %v1430 = vadd.f32 0.0, %v1429
        %v1431 = vpop.f32.mrb[0].mxu0
        %1432 = vdwg.mxu0
        %v1433 = vrcp.pop %v1357
        %1435 = vset.pattern.permute.xlu0 0
        %1436 = vperm.xlu0 %1435, %v1433
        %v1437 = vpop.permute.xlu0 %1436
        %v1439 = vmul.f32 %v1430, %v1437
        %v1440 = vadd.f32 %v1202, %v1439
        %v1441 = vadd.f32 %v288, %v1440
        %v1442 = vsel %vm293, %v1441, 0.0
        %1443 = vadd.xlane.f32.xlu0 %v1442
        %v1444 = vpop.xlane.xlu0 %1443
        %v1445 = vmul.f32 %v1444, %v297
        %v1446 = vsub.f32 %v1441, %v1445
        %v1447 = vmul.f32 %v1446, %v1446
        %v1448 = vsel %vm293, %v1447, 0.0
        %1449 = vadd.xlane.f32.xlu0 %v1448
        %v1450 = vpop.xlane.xlu0 %1449
        %v1451 = vmul.f32 %v1450, 0.032258064
        %v1452 = vrsqrt.pop %v1451
        %v1453 = vmul.f32 %v1451, %v1452
        %vm1454 = vcmp.eq.f32.partialorder %v1451, inf
        %v1455 = vsel %vm1454, %v1451, %v1453
        %vm1456 = vcmp.eq.f32.partialorder %v1451, 0.0
        %v1457 = vand.u32 %v1451, 2147483648
        %v1458 = vsel %vm1456, %v1457, %v1455
        %v1459 = vadd.f32 %v1458, 1e-06
        %v1460 = vrcp.pop %v1459
        %v1461 = vmul.f32 1.0, %v1460
        %v1462 = vmul.f32 %v1446, %v1461
        %v1463 = vlaneseq
        %v1464 = vshrl.u32 %v1463, 7
        %v1465 = vsub.s32 6, %v1464
        %v1466 = vrot.slane %v289, %v1465
        %v1467 = vmul.f32 %v1466, %v1462
        %v1468 = vlaneseq
        %v1469 = vshrl.u32 %v1468, 7
        %v1470 = vsub.s32 7, %v1469
        %v1471 = vrot.slane %v289, %v1470
        %v1472 = vadd.f32 %v1467, %v1471
        %v1473 = vld [vmem:[%s4] sm:$0xff]
        %v1474 = vld [vmem:[%s4 + $0x8] sm:$0xff]
        %v1475 = vld [vmem:[%s4 + $0x10] sm:$0xff]
        %v1476 = vld [vmem:[%s4 + $0x18] sm:$0xff]
        %v1477 = vlaneseq
        %v1478 = vshrl.u32 %v1477, 7
        %v1479 = vsub.s32 2, %v1478
        %v1480 = vrot.slane %v289, %v1479
        %v1482 = vsel %vm293, %v1472, 0
        %1484 = vmatprep.subr.mxu0 0.0
        %1485 = vmatpush1.msra.mxu0 %v1473
        %1486 = vmatprep.subr.mxu0 0.0
        %1487 = vmatpush1.msra.mxu0 %v1474
        %1488 = vmatprep.subr.mxu0 0.0
        %1489 = vmatpush1.msra.mxu0 %v1475
        %1490 = vmatprep.subr.mxu0 0.0
        %1491 = vmatpush1.msra.mxu0 %v1476
        %1492 = vmatprep.subr.mxu0 0.0
        %1493 = vmatpush1.msra.mxu0 0.0
        %1494 = vmatprep.subr.mxu0 0.0
        %1495 = vmatpush1.msra.mxu0 0.0
        %1496 = vmatprep.subr.mxu0 0.0
        %1497 = vmatpush1.msra.mxu0 0.0
        %1498 = vmatprep.subr.mxu0 0.0
        %1499 = vmatpush1.msra.mxu0 0.0
        %1500 = vmatprep.subr.mxu0 0.0
        %1501 = vmatpush1.msra.mxu0 0.0
        %1502 = vmatprep.subr.mxu0 0.0
        %1503 = vmatpush1.msra.mxu0 0.0
        %1504 = vmatprep.subr.mxu0 0.0
        %1505 = vmatpush1.msra.mxu0 0.0
        %1506 = vmatprep.subr.mxu0 0.0
        %1507 = vmatpush1.msra.mxu0 0.0
        %1508 = vmatprep.subr.mxu0 0.0
        %1509 = vmatpush1.msra.mxu0 0.0
        %1510 = vmatprep.subr.mxu0 0.0
        %1511 = vmatpush1.msra.mxu0 0.0
        %1512 = vmatprep.subr.mxu0 0.0
        %1513 = vmatpush1.msra.mxu0 0.0
        %1514 = vmatprep.subr.mxu0 0.0
        %1515 = vmatpush1.msra.mxu0 0.0
        %1516 = vmatprep.subr.mxu0 0.0
        %1517 = vmatpush1.msra.mxu0 0.0
        %1518 = vmatprep.subr.mxu0 0.0
        %1519 = vmatpush1.msra.mxu0 0.0
        %1520 = vmatprep.subr.mxu0 0.0
        %1521 = vmatpush1.msra.mxu0 0.0
        %1522 = vmatprep.subr.mxu0 0.0
        %1523 = vmatpush1.msra.mxu0 0.0
        %1524 = vmatprep.subr.mxu0 0.0
        %1525 = vmatpush1.msra.mxu0 0.0
        %1526 = vmatprep.subr.mxu0 0.0
        %1527 = vmatpush1.msra.mxu0 0.0
        %1528 = vmatprep.subr.mxu0 0.0
        %1529 = vmatpush1.msra.mxu0 0.0
        %1530 = vmatprep.subr.mxu0 0.0
        %1531 = vmatpush1.msra.mxu0 0.0
        %1532 = vmatprep.subr.mxu0 0.0
        %1533 = vmatpush1.msra.mxu0 0.0
        %1534 = vmatprep.subr.mxu0 0.0
        %1535 = vmatpush1.msra.mxu0 0.0
        %1536 = vmatprep.subr.mxu0 0.0
        %1537 = vmatpush1.msra.mxu0 0.0
        %1538 = vmatprep.subr.mxu0 0.0
        %1539 = vmatpush1.msra.mxu0 0.0
        %1540 = vmatprep.subr.mxu0 0.0
        %1541 = vmatpush1.msra.mxu0 0.0
        %1542 = vmatprep.subr.mxu0 0.0
        %1543 = vmatpush1.msra.mxu0 0.0
        %1544 = vmatprep.subr.mxu0 0.0
        %1545 = vmatpush1.msra.mxu0 0.0
        %1546 = vmatprep.subr.mxu0 0.0
        %1547 = vmatpush1.msra.mxu0 0.0
        %1548 = vmatprep.mubr.f32.mxu0 0.0
        %1549 = vmatmul.mubr.f32.gmra.mrb[0].mxu0 %v1482
        %v1550 = vpop.f32.mrb[0].mxu0
        %v1551 = vadd.f32 %v1480, %v1550
        %v1552 = vpop.f32.mrb[0].mxu0
        %1553 = vdwg.mxu0
        %v1554 = vmax.f32 %v1551, 0.0
        %v1555 = vld [vmem:[%s5] sm:$0xff]
        %v1556 = vld [vmem:[%s5 + $0x8] sm:$0xff]
        %v1557 = vld [vmem:[%s5 + $0x10] sm:$0xff]
        %v1558 = vld [vmem:[%s5 + $0x18] sm:$0xff]
        %v1559 = vld [vmem:[%s5 + $0x20] sm:$0xff]
        %v1560 = vld [vmem:[%s5 + $0x28] sm:$0xff]
        %v1561 = vld [vmem:[%s5 + $0x30] sm:$0xff]
        %v1562 = vld [vmem:[%s5 + $0x38] sm:$0xff]
        %v1563 = vlaneseq
        %v1564 = vshrl.u32 %v1563, 7
        %v1565 = vsub.s32 3, %v1564
        %v1566 = vrot.slane %v289, %v1565
        %vm1567 = vcmask 523264
        %v1569 = vsel %vm1567, %v1554, 0
        %1571 = vmatprep.subr.mxu0 0.0
        %1572 = vmatpush1.msra.mxu0 %v1555
        %1573 = vmatprep.subr.mxu0 0.0
        %1574 = vmatpush1.msra.mxu0 %v1556
        %1575 = vmatprep.subr.mxu0 0.0
        %1576 = vmatpush1.msra.mxu0 %v1557
        %1577 = vmatprep.subr.mxu0 0.0
        %1578 = vmatpush1.msra.mxu0 %v1558
        %1579 = vmatprep.subr.mxu0 0.0
        %1580 = vmatpush1.msra.mxu0 %v1559
        %1581 = vmatprep.subr.mxu0 0.0
        %1582 = vmatpush1.msra.mxu0 %v1560
        %1583 = vmatprep.subr.mxu0 0.0
        %1584 = vmatpush1.msra.mxu0 %v1561
        %1585 = vmatprep.subr.mxu0 0.0
        %1586 = vmatpush1.msra.mxu0 %v1562
        %1587 = vmatprep.subr.mxu0 0.0
        %1588 = vmatpush1.msra.mxu0 0.0
        %1589 = vmatprep.subr.mxu0 0.0
        %1590 = vmatpush1.msra.mxu0 0.0
        %1591 = vmatprep.subr.mxu0 0.0
        %1592 = vmatpush1.msra.mxu0 0.0
        %1593 = vmatprep.subr.mxu0 0.0
        %1594 = vmatpush1.msra.mxu0 0.0
        %1595 = vmatprep.subr.mxu0 0.0
        %1596 = vmatpush1.msra.mxu0 0.0
        %1597 = vmatprep.subr.mxu0 0.0
        %1598 = vmatpush1.msra.mxu0 0.0
        %1599 = vmatprep.subr.mxu0 0.0
        %1600 = vmatpush1.msra.mxu0 0.0
        %1601 = vmatprep.subr.mxu0 0.0
        %1602 = vmatpush1.msra.mxu0 0.0
        %1603 = vmatprep.subr.mxu0 0.0
        %1604 = vmatpush1.msra.mxu0 0.0
        %1605 = vmatprep.subr.mxu0 0.0
        %1606 = vmatpush1.msra.mxu0 0.0
        %1607 = vmatprep.subr.mxu0 0.0
        %1608 = vmatpush1.msra.mxu0 0.0
        %1609 = vmatprep.subr.mxu0 0.0
        %1610 = vmatpush1.msra.mxu0 0.0
        %1611 = vmatprep.subr.mxu0 0.0
        %1612 = vmatpush1.msra.mxu0 0.0
        %1613 = vmatprep.subr.mxu0 0.0
        %1614 = vmatpush1.msra.mxu0 0.0
        %1615 = vmatprep.subr.mxu0 0.0
        %1616 = vmatpush1.msra.mxu0 0.0
        %1617 = vmatprep.subr.mxu0 0.0
        %1618 = vmatpush1.msra.mxu0 0.0
        %1619 = vmatprep.subr.mxu0 0.0
        %1620 = vmatpush1.msra.mxu0 0.0
        %1621 = vmatprep.subr.mxu0 0.0
        %1622 = vmatpush1.msra.mxu0 0.0
        %1623 = vmatprep.subr.mxu0 0.0
        %1624 = vmatpush1.msra.mxu0 0.0
        %1625 = vmatprep.subr.mxu0 0.0
        %1626 = vmatpush1.msra.mxu0 0.0
        %1627 = vmatprep.subr.mxu0 0.0
        %1628 = vmatpush1.msra.mxu0 0.0
        %1629 = vmatprep.subr.mxu0 0.0
        %1630 = vmatpush1.msra.mxu0 0.0
        %1631 = vmatprep.subr.mxu0 0.0
        %1632 = vmatpush1.msra.mxu0 0.0
        %1633 = vmatprep.subr.mxu0 0.0
        %1634 = vmatpush1.msra.mxu0 0.0
        %1635 = vmatprep.mubr.f32.mxu0 0.0
        %1636 = vmatmul.mubr.f32.gmra.mrb[0].mxu0 %v1569
        %v1637 = vpop.f32.mrb[0].mxu0
        %v1638 = vadd.f32 %v1566, %v1637
        %v1639 = vpop.f32.mrb[0].mxu0
        %1640 = vdwg.mxu0
        %v1641 = vadd.f32 %v1441, %v1638
        %1642 = vst.msk [vmem:[%s280] sm:$0xff] %vm293, %v1641
        %s1643 = sand.u32 %s186, 1
        %s1644 = scalar_lea.sflag [#allocation3], %s1643
        %s1645 = sand.u32 %s186, 1
        %s1646 = smul.addr %s1645, 8
        %s1647 = scalar_lea.vmem [#allocation2], %s1646
        // Predicated region
        $region49: #{encoder_layer.1} parent=47 // pred_check
          %p1648 = pneg %p196
        $region50: #{encoder_layer.1} parent=47 // pred_check_branch
          %1650 = sbr.rel (%p1648) target = $region52
        $region51: #{encoder_layer.1} parent=47 // pred_region
          %s1652 = ssub.s32 128, 128
          %1653 = vsyncadd %s1644, %s1652
          %s1654 = smul.addr %s21, 128
          %s1655 = scalar_lea.hbm %s7, %s1654
          %s1657 = sshll.u32 %s1647, 4
          %s1658 = int_to_ptr.vmem [resolvable:$true] %s1657
          %1660 = dma.vmem_to_hbm [thread:$0]  %s1658, 128, %s1655, %s1644
        $region52: #{encoder_layer.1} parent=47 // pred_fallthru
          _
      $region48: #{encoder_layer.1} parent=5 // pred_fallthru
        _
      %p1661 = scmp.le.s32.totalorder 2, %s16
      // Predicated region
      $region53: #{encoder_layer.1} parent=5 // pred_check
        %p1662 = pneg %p1661
      $region54: #{encoder_layer.1} parent=5 // pred_check_branch
        %1664 = sbr.rel (%p1662) target = $region56
      $region55: #{encoder_layer.1} parent=5 // pred_region
        %s1665 = ssub.s32 %s16, 2
        // Predicated region
        $region57: #{encoder_layer.1} parent=55 // pred_check
          %p1666 = pneg %p202
        $region58: #{encoder_layer.1} parent=55 // pred_check_branch
          %1668 = sbr.rel (%p1666) target = $region60
        $region59: #{encoder_layer.1} parent=55 // pred_region
          %s1669 = sand.u32 %s187, 1
          %s1670 = scalar_lea.sflag [#allocation3], %s1669
          %s1671 = sand.u32 %s187, 1
          %s1672 = smul.addr %s1671, 8
          %s1673 = scalar_lea.vmem [#allocation2], %s1672
          %1674 = dma.done %s1670, 128
        $region60: #{encoder_layer.1} parent=55 // pred_fallthru
          _
      $region56: #{encoder_layer.1} parent=5 // pred_fallthru
        _
    $region6: #{encoder_layer.1} parent=1 // loop_footer
      %s20 = sadd.s32 1, %s16
    $region7: #{encoder_layer.1} parent=1 // loop_footer_branch
      %15 = sbr.rel target = $region3
    $region8: #{encoder_layer.1} parent=1 // loop_exit
      _
    %1675 = vsyncpa [#allocation3], 1
    %s1676 = scalar_lea.sflag [#allocation3], 1
    %1677 = vsyncpa %s1676, 1

</llo_original>
